<compile_context>
chip_gen: v6e
topology: v6e:2x2x1
jax: 0.10.0
libtpu: 0.0.40
codegen_flags: <defaults>
</compile_context>

<pallas_src>
import math

import numpy as np
import jax
import jax.numpy as jnp
from jax.experimental import pallas as pl
from jax.experimental.pallas import tpu as pltpu


# ----------------------------------------------------------------------------
# In-kernel helpers.
# ----------------------------------------------------------------------------
def _shift_cols(x, s):
    """x[:, i] <- x[:, i + s], zero fill at the right end (lane shift)."""
    if s == 0:
        return x
    c = x.shape[0]
    return jnp.concatenate([x[:, s:], jnp.zeros((c, s), x.dtype)], axis=1)


def _make_kernel(plan, n_prep):
    """Build the fused kernel body: interprets the (static) layer plan."""

    def kernel(*refs):
        x_ref, ctx_ref = refs[0], refs[1]
        prep = refs[2:2 + n_prep]
        o_ref = refs[2 + n_prep]

        val = x_ref[...]                      # (Cin, N*Hp*Wp), lane-dense
        ctx_row = ctx_ref[...]                # (1, num_context_params)

        for step in plan:
            kind = step['kind']
            slots = step['slots']

            def g(name, _slots=slots):
                return prep[_slots[name]][...]

            if kind == 'conv':
                if 'regrid' in slots:
                    # gather pooled (strided) values into a fresh zero-padded
                    # flat grid for this conv (0/1 selection matrix, MXU).
                    val = jnp.dot(val, g('regrid'),
                                  preferred_element_type=jnp.float32)
                # im2col: KH*KW lane-shifted copies stacked on sublanes.
                pieces = [_shift_cols(val, s) for s in step['shifts']]
                patches = jnp.concatenate(pieces, axis=0)   # (KH*KW*Cin, L)
                val = jnp.dot(g('w'), patches,
                              preferred_element_type=jnp.float32) + g('b')

            elif kind == 'bn':
                # training-mode batch norm, one-pass masked stats, applied as
                # a single per-channel scale+shift; optional fused ReLU.
                m = g('mask')                               # (1, L) 0/1
                inv_cnt = 1.0 / step['count']
                xm = val * m
                s1 = jnp.sum(xm, axis=1, keepdims=True)
                s2 = jnp.sum(xm * val, axis=1, keepdims=True)
                mean = s1 * inv_cnt
                var = jnp.maximum(s2 * inv_cnt - mean * mean, 0.0)
                scale = g('gamma') * jax.lax.rsqrt(var + 1e-5)   # (C, 1)
                shift = g('beta') - mean * scale                 # (C, 1)
                val = val * scale + shift
                if step['relu']:
                    val = jnp.maximum(val, 0.0)

            elif kind == 'relu':
                val = jnp.maximum(val, 0.0)

            elif kind == 'pool':
                # 2x2 / stride-2 max pool: two vectorized shift+max passes.
                wp = step['Wp']
                mh = jnp.maximum(val, _shift_cols(val, 1))
                val = jnp.maximum(mh, _shift_cols(mh, wp))
                if step['film']:
                    gamma = (jnp.sum(g('wg') * ctx_row, axis=1, keepdims=True)
                             + g('bg'))                      # (C, 1)
                    beta = (jnp.sum(g('wb') * ctx_row, axis=1, keepdims=True)
                            + g('bb'))
                    val = gamma * val + beta

            elif kind == 'flatten':
                # gather pooled values into (h,w)-major / n-minor column order,
                # then stack spatial slices on sublanes -> (S*C, N) features.
                S, n_b = step['S'], step['N']
                zc = jnp.dot(val, g('perm'),
                             preferred_element_type=jnp.float32)  # (C, S*N)
                val = jnp.concatenate(
                    [zc[:, s * n_b:(s + 1) * n_b] for s in range(S)], axis=0)

            elif kind == 'linear':
                # weight pre-permuted to match the (s, c) feature row order.
                val = jnp.dot(g('w'), val,
                              preferred_element_type=jnp.float32) + g('b')

            else:
                raise NotImplementedError(kind)

        o_ref[...] = val                      # (out_features, N)

    return kernel


# ----------------------------------------------------------------------------
# Builder: walks the config once, produces static plan + constant gather
# matrices + a parameter-preprocessing function + the fused forward.
# ----------------------------------------------------------------------------
def build_learner(config, context_in, num_context_params, x_shape):
    N, Cin, Hin, Win = x_shape
    nc = num_context_params

    first_pad = None
    for name, p in config:
        if name == 'conv2d':
            first_pad = p[5]
            break
    assert first_pad is not None, 'config must contain a conv2d'

    # activation state: padded flat grid (Hp, Wp), valid region of size
    # (Hv, Wv) starting at offset (oh, ow) with strides (sh, sw).
    st = dict(C=Cin, Hp=Hin + 2 * first_pad, Wp=Win + 2 * first_pad,
              oh=first_pad, ow=first_pad, sh=1, sw=1, Hv=Hin, Wv=Win,
              zero=True, mode='spatial')

    plan = []
    prep_makers = []      # ('const', array) or ('param', (param_idx, fn))
    n_slots = 0

    def add_const(arr):
        nonlocal n_slots
        prep_makers.append(('const', jnp.asarray(arr, jnp.float32)))
        n_slots += 1
        return n_slots - 1

    def add_param(pi, fn):
        nonlocal n_slots
        prep_makers.append(('param', (pi, fn)))
        n_slots += 1
        return n_slots - 1

    def valid_flat_positions():
        pos = []
        for n in range(N):
            for h in range(st['Hv']):
                for w in range(st['Wv']):
                    pos.append((n, h, w,
                                n * st['Hp'] * st['Wp']
                                + (st['oh'] + st['sh'] * h) * st['Wp']
                                + (st['ow'] + st['sw'] * w)))
        return pos

    idx = 0          # parameter index (PyTorch ParameterList order)
    idx_layer = 1    # same convention as Learner.__init__
    out_f = None

    for name, p in config:
        if name == 'conv2d':
            cout, cin, kh, kw, stride, pad = p[0], p[1], p[2], p[3], p[4], p[5]
            assert stride == 1, 'only stride-1 convs supported'
            assert st['mode'] == 'spatial' and cin == st['C']
            slots = {}
            canonical = (st['oh'] == pad and st['ow'] == pad
                         and st['sh'] == 1 and st['sw'] == 1
                         and st['Hp'] == st['Hv'] + 2 * pad
                         and st['Wp'] == st['Wv'] + 2 * pad and st['zero'])
            if not canonical:
                hp2, wp2 = st['Hv'] + 2 * pad, st['Wv'] + 2 * pad
                R = np.zeros((N * st['Hp'] * st['Wp'], N * hp2 * wp2),
                             np.float32)
                for n, h, w, src in valid_flat_positions():
                    R[src, n * hp2 * wp2 + (pad + h) * wp2 + (pad + w)] = 1.0
                slots['regrid'] = add_const(R)
                st.update(Hp=hp2, Wp=wp2, oh=pad, ow=pad, sh=1, sw=1,
                          zero=True)
            wp = st['Wp']
            shifts = [i * wp + j for i in range(kh) for j in range(kw)]
            slots['w'] = add_param(
                idx, lambda w, cout=cout, kh=kh, kw=kw, cin=cin:
                jnp.transpose(w, (0, 2, 3, 1)).reshape(cout, kh * kw * cin))
            slots['b'] = add_param(idx + 1, lambda b: b.reshape(-1, 1))
            idx += 2
            ho = st['Hv'] + 2 * pad - kh + 1
            wo = st['Wv'] + 2 * pad - kw + 1
            plan.append(dict(kind='conv', shifts=shifts, slots=slots))
            st.update(C=cout, oh=0, ow=0, Hv=ho, Wv=wo, zero=False)
            idx_layer += 1

        elif name == 'bn':
            assert st['mode'] == 'spatial'
            mask = np.zeros((1, N * st['Hp'] * st['Wp']), np.float32)
            for _, _, _, src in valid_flat_positions():
                mask[0, src] = 1.0
            slots = dict(gamma=add_param(idx, lambda g: g.reshape(-1, 1)),
                         beta=add_param(idx + 1, lambda b: b.reshape(-1, 1)),
                         mask=add_const(mask))
            idx += 2
            plan.append(dict(kind='bn', slots=slots, relu=False,
                             count=float(N * st['Hv'] * st['Wv'])))

        elif name == 'relu':
            if plan and plan[-1]['kind'] == 'bn' and not plan[-1]['relu']:
                plan[-1]['relu'] = True        # fuse ReLU into preceding BN
            else:
                plan.append(dict(kind='relu', slots={}))

        elif name == 'max_pool2d':
            assert p[0] == 2 and p[1] == 2 and p[2] == 0, \
                'only 2x2/stride-2/pad-0 pooling supported'
            assert st['mode'] == 'spatial' and st['sh'] == 1 and st['sw'] == 1
            assert st['Hv'] % 2 == 0 and st['Wv'] % 2 == 0
            has_film = bool(context_in[idx_layer - 2])
            slots = {}
            if has_film:
                C = st['C']
                slots['wg'] = add_param(idx, lambda w, C=C: w[:C, :])
                slots['wb'] = add_param(idx, lambda w, C=C: w[C:, :])
                slots['bg'] = add_param(idx + 1,
                                        lambda b, C=C: b[:C].reshape(-1, 1))
                slots['bb'] = add_param(idx + 1,
                                        lambda b, C=C: b[C:].reshape(-1, 1))
                idx += 2
            plan.append(dict(kind='pool', Wp=st['Wp'], film=has_film,
                             slots=slots))
            st.update(Hv=st['Hv'] // 2, Wv=st['Wv'] // 2,
                      sh=2 * st['sh'], sw=2 * st['sw'], zero=False)

        elif name == 'flatten':
            assert st['mode'] == 'spatial'
            Hv, Wv, C = st['Hv'], st['Wv'], st['C']
            S = Hv * Wv
            P = np.zeros((N * st['Hp'] * st['Wp'], S * N), np.float32)
            for n, h, w, src in valid_flat_positions():
                P[src, (h * Wv + w) * N + n] = 1.0
            plan.append(dict(kind='flatten', slots=dict(perm=add_const(P)),
                             S=S, N=N))
            st.update(mode='flat', feat_S=S, feat_C=C)

        elif name == 'linear':
            assert st['mode'] == 'flat', 'linear only supported after flatten'
            out_f, in_f = p[0], p[1]
            S, C = st['feat_S'], st['feat_C']
            assert in_f == S * C
            # permute columns so they match the (s, c) feature row order AND
            # absorb PyTorch's NCHW flatten ordering (c-major, spatial-minor).
            slots = dict(
                w=add_param(idx, lambda w, out_f=out_f, C=C, S=S:
                            jnp.transpose(w.reshape(out_f, C, S),
                                          (0, 2, 1)).reshape(out_f, S * C)),
                b=add_param(idx + 1, lambda b: b.reshape(-1, 1)))
            idx += 2
            plan.append(dict(kind='linear', slots=slots))
            st.update(mode='out', out_f=out_f)
            idx_layer += 1

        else:
            raise NotImplementedError(name)

    assert st['mode'] == 'out'
    n_params_used = idx
    n_prep = n_slots
    kernel = _make_kernel(plan, n_prep)
    hp0, wp0 = Hin + 2 * first_pad, Win + 2 * first_pad

    def prep_fn(params):
        """One-time parameter preprocessing (hoisted out of the forward)."""
        assert n_params_used == len(params)
        out = []
        for kind, info in prep_makers:
            if kind == 'const':
                out.append(info)
            else:
                pi, fn = info
                out.append(jnp.asarray(fn(params[pi]), jnp.float32))
        return out

    def forward_fn(prepared, context_params, x_nchw, bn_training=True):
        # TODO(synk): eval-mode BN (running stats) and running-stat updates are
        # not implemented; only bn_training=True (batch statistics) is used.
        assert bn_training
        # entry layout plumbing (tiny XLA ops): NCHW -> zero-padded flat
        # (Cin, N*Hp*Wp) with batch*spatial lane-dense.
        xp = jnp.pad(x_nchw.astype(jnp.float32),
                     ((0, 0), (0, 0), (first_pad, first_pad),
                      (first_pad, first_pad)))
        xf = jnp.transpose(xp, (1, 0, 2, 3)).reshape(Cin, N * hp0 * wp0)
        ctx = context_params.reshape(1, nc).astype(jnp.float32)

        vmem = pl.BlockSpec(memory_space=pltpu.MemorySpace.VMEM)
        out_t = pl.pallas_call(
            kernel,
            out_shape=jax.ShapeDtypeStruct((out_f, N), jnp.float32),
            in_specs=[vmem] * (2 + n_prep),
            out_specs=vmem,
        )(xf, ctx, *prepared)
        return out_t.T                        # (N, out_features)

    return prep_fn, forward_fn


# ----------------------------------------------------------------------------
# Parameter init (deterministic, mirrors Learner.__init__ shapes / init style).
# ----------------------------------------------------------------------------
def _kaiming_uniform(key, shape, fan_in, gain):
    bound = gain * math.sqrt(3.0 / fan_in)
    return jax.random.uniform(key, shape, jnp.float32, -bound, bound)


def init_learner_params(key, config, num_context_params, context_in):
    params = []
    idx_layer = 1
    n_filter = None
    for name, p in config:
        if name == 'conv2d':
            cout, cin, kh, kw = p[0], p[1], p[2], p[3]
            key, k1 = jax.random.split(key)
            params.append(_kaiming_uniform(k1, (cout, cin, kh, kw),
                                           cin * kh * kw, math.sqrt(2.0)))
            params.append(jnp.zeros((cout,), jnp.float32))
            n_filter = cout
            idx_layer += 1
        elif name == 'linear':
            out_f, in_f = p
            key, k1 = jax.random.split(key)
            params.append(_kaiming_uniform(k1, (out_f, in_f), in_f, 1.0))
            params.append(jnp.zeros((out_f,), jnp.float32))
            idx_layer += 1
        elif name == 'bn':
            c = p[0]
            params.append(jnp.ones((c,), jnp.float32))
            params.append(jnp.zeros((c,), jnp.float32))
        elif name == 'max_pool2d':
            if context_in[idx_layer - 2]:
                key, k1, k2 = jax.random.split(key, 3)
                params.append(_kaiming_uniform(
                    k1, (2 * n_filter, num_context_params),
                    num_context_params, math.sqrt(2.0)))
                bound = 1.0 / math.sqrt(num_context_params)
                params.append(jax.random.uniform(
                    k2, (2 * n_filter,), jnp.float32, -bound, bound))
        elif name in ('relu', 'flatten', 'tanh', 'upsample', 'avg_pool2d',
                      'leakyrelu', 'sigmoid', 'reshape'):
            continue
        else:
            raise NotImplementedError(name)
    return params


# ----------------------------------------------------------------------------
if __name__ == "__main__":
    key = jax.random.PRNGKey(0)
    N, Cin, Hin, Win = 2, 4, 16, 16
    n_filter = 8
    n_classes = 5
    num_context_params = 8
    context_in = [True, True, False]

    config = [
        ('conv2d', [n_filter, Cin, 3, 3, 1, 1]),
        ('bn', [n_filter]),
        ('relu', [True]),
        ('max_pool2d', [2, 2, 0]),
        ('conv2d', [n_filter, n_filter, 3, 3, 1, 1]),
        ('bn', [n_filter]),
        ('relu', [True]),
        ('max_pool2d', [2, 2, 0]),
        ('flatten', []),
        ('linear', [n_classes, n_filter * (Hin // 4) * (Win // 4)]),
    ]

    kp, kx = jax.random.split(key)
    params = init_learner_params(kp, config, num_context_params, context_in)
    context_params = jnp.zeros((num_context_params,), jnp.float32)
    x = jax.random.normal(kx, (N, Cin, Hin, Win), jnp.float32)

    prep_fn, forward_fn = build_learner(config, context_in,
                                        num_context_params,
                                        (N, Cin, Hin, Win))
    prepared = prep_fn(params)        # one-time weight re-layout (hoisted)

    fwd = jax.jit(lambda ctx, inp: forward_fn(prepared, ctx, inp))
    out = fwd(context_params, x)
    jax.block_until_ready(out)
    assert out.shape == (N, n_classes)
    assert bool(jnp.all(jnp.isfinite(out)))
    print("KERNEL_OK")
</pallas_src>

<mosaic_0001>
module attributes {stable_mosaic.version = 11 : i64} {
  func.func @kernel(%arg0: memref<4x648xf32, #tpu.memory_space<vmem>>, %arg1: memref<1x8xf32, #tpu.memory_space<vmem>>, %arg2: memref<8x36xf32, #tpu.memory_space<vmem>>, %arg3: memref<8x1xf32, #tpu.memory_space<vmem>>, %arg4: memref<8x1xf32, #tpu.memory_space<vmem>>, %arg5: memref<8x1xf32, #tpu.memory_space<vmem>>, %arg6: memref<1x648xf32, #tpu.memory_space<vmem>>, %arg7: memref<8x8xf32, #tpu.memory_space<vmem>>, %arg8: memref<8x8xf32, #tpu.memory_space<vmem>>, %arg9: memref<8x1xf32, #tpu.memory_space<vmem>>, %arg10: memref<8x1xf32, #tpu.memory_space<vmem>>, %arg11: memref<648x200xf32, #tpu.memory_space<vmem>>, %arg12: memref<8x72xf32, #tpu.memory_space<vmem>>, %arg13: memref<8x1xf32, #tpu.memory_space<vmem>>, %arg14: memref<8x1xf32, #tpu.memory_space<vmem>>, %arg15: memref<8x1xf32, #tpu.memory_space<vmem>>, %arg16: memref<1x200xf32, #tpu.memory_space<vmem>>, %arg17: memref<8x8xf32, #tpu.memory_space<vmem>>, %arg18: memref<8x8xf32, #tpu.memory_space<vmem>>, %arg19: memref<8x1xf32, #tpu.memory_space<vmem>>, %arg20: memref<8x1xf32, #tpu.memory_space<vmem>>, %arg21: memref<200x32xf32, #tpu.memory_space<vmem>>, %arg22: memref<5x128xf32, #tpu.memory_space<vmem>>, %arg23: memref<5x1xf32, #tpu.memory_space<vmem>>, %arg24: memref<5x2xf32, #tpu.memory_space<vmem>>) attributes {dimension_semantics = [], scalar_prefetch = 0 : i64, scratch_operands = 0 : i64, tpu.core_type = #tpu.core_type<tc>} {
    %c0 = arith.constant 0 : index
    %c0_0 = arith.constant 0 : index
    %0 = vector.load %arg0[%c0, %c0_0] : memref<4x648xf32, #tpu.memory_space<vmem>>, vector<4x648xf32>
    %c0_1 = arith.constant 0 : index
    %c0_2 = arith.constant 0 : index
    %1 = vector.load %arg1[%c0_1, %c0_2] : memref<1x8xf32, #tpu.memory_space<vmem>>, vector<1x8xf32>
    %2 = vector.extract_strided_slice %0 {offsets = [0, 1], sizes = [4, 647], strides = [1, 1]} : vector<4x648xf32> to vector<4x647xf32>
    %cst = arith.constant 0.000000e+00 : f32
    %3 = vector.broadcast %cst : f32 to vector<4x1xf32>
    %4 = tpu.concatenate %2, %3 in 1 : vector<4x647xf32>, vector<4x1xf32> -> vector<4x648xf32>
    %5 = vector.extract_strided_slice %0 {offsets = [0, 2], sizes = [4, 646], strides = [1, 1]} : vector<4x648xf32> to vector<4x646xf32>
    %cst_3 = arith.constant 0.000000e+00 : f32
    %6 = vector.broadcast %cst_3 : f32 to vector<4x2xf32>
    %7 = tpu.concatenate %5, %6 in 1 : vector<4x646xf32>, vector<4x2xf32> -> vector<4x648xf32>
    %8 = vector.extract_strided_slice %0 {offsets = [0, 18], sizes = [4, 630], strides = [1, 1]} : vector<4x648xf32> to vector<4x630xf32>
    %cst_4 = arith.constant 0.000000e+00 : f32
    %9 = vector.broadcast %cst_4 : f32 to vector<4x18xf32>
    %10 = tpu.concatenate %8, %9 in 1 : vector<4x630xf32>, vector<4x18xf32> -> vector<4x648xf32>
    %11 = vector.extract_strided_slice %0 {offsets = [0, 19], sizes = [4, 629], strides = [1, 1]} : vector<4x648xf32> to vector<4x629xf32>
    %cst_5 = arith.constant 0.000000e+00 : f32
    %12 = vector.broadcast %cst_5 : f32 to vector<4x19xf32>
    %13 = tpu.concatenate %11, %12 in 1 : vector<4x629xf32>, vector<4x19xf32> -> vector<4x648xf32>
    %14 = vector.extract_strided_slice %0 {offsets = [0, 20], sizes = [4, 628], strides = [1, 1]} : vector<4x648xf32> to vector<4x628xf32>
    %cst_6 = arith.constant 0.000000e+00 : f32
    %15 = vector.broadcast %cst_6 : f32 to vector<4x20xf32>
    %16 = tpu.concatenate %14, %15 in 1 : vector<4x628xf32>, vector<4x20xf32> -> vector<4x648xf32>
    %17 = vector.extract_strided_slice %0 {offsets = [0, 36], sizes = [4, 612], strides = [1, 1]} : vector<4x648xf32> to vector<4x612xf32>
    %cst_7 = arith.constant 0.000000e+00 : f32
    %18 = vector.broadcast %cst_7 : f32 to vector<4x36xf32>
    %19 = tpu.concatenate %17, %18 in 1 : vector<4x612xf32>, vector<4x36xf32> -> vector<4x648xf32>
    %20 = vector.extract_strided_slice %0 {offsets = [0, 37], sizes = [4, 611], strides = [1, 1]} : vector<4x648xf32> to vector<4x611xf32>
    %cst_8 = arith.constant 0.000000e+00 : f32
    %21 = vector.broadcast %cst_8 : f32 to vector<4x37xf32>
    %22 = tpu.concatenate %20, %21 in 1 : vector<4x611xf32>, vector<4x37xf32> -> vector<4x648xf32>
    %23 = vector.extract_strided_slice %0 {offsets = [0, 38], sizes = [4, 610], strides = [1, 1]} : vector<4x648xf32> to vector<4x610xf32>
    %cst_9 = arith.constant 0.000000e+00 : f32
    %24 = vector.broadcast %cst_9 : f32 to vector<4x38xf32>
    %25 = tpu.concatenate %23, %24 in 1 : vector<4x610xf32>, vector<4x38xf32> -> vector<4x648xf32>
    %26 = tpu.concatenate %0, %4, %7, %10, %13, %16, %19, %22, %25 in 0 : vector<4x648xf32>, vector<4x648xf32>, vector<4x648xf32>, vector<4x648xf32>, vector<4x648xf32>, vector<4x648xf32>, vector<4x648xf32>, vector<4x648xf32>, vector<4x648xf32> -> vector<36x648xf32>
    %c0_10 = arith.constant 0 : index
    %c0_11 = arith.constant 0 : index
    %27 = vector.load %arg2[%c0_10, %c0_11] : memref<8x36xf32, #tpu.memory_space<vmem>>, vector<8x36xf32>
    %cst_12 = arith.constant dense<0.000000e+00> : vector<8x648xf32>
    %28 = tpu.matmul %27, %26, %cst_12 {dimension_numbers = #tpu.dot_dimension_numbers<[1], [0], [0], [1], [0, 0, 1, 1], [], []>} : vector<8x36xf32>, vector<36x648xf32>, vector<8x648xf32> -> vector<8x648xf32>
    %c0_13 = arith.constant 0 : index
    %c0_14 = arith.constant 0 : index
    %29 = vector.load %arg3[%c0_13, %c0_14] : memref<8x1xf32, #tpu.memory_space<vmem>>, vector<8x1xf32>
    %30 = vector.broadcast %29 : vector<8x1xf32> to vector<8x648xf32>
    %31 = arith.addf %28, %30 : vector<8x648xf32>
    %c0_15 = arith.constant 0 : index
    %c0_16 = arith.constant 0 : index
    %32 = vector.load %arg6[%c0_15, %c0_16] : memref<1x648xf32, #tpu.memory_space<vmem>>, vector<1x648xf32>
    %33 = vector.broadcast %32 : vector<1x648xf32> to vector<8x648xf32>
    %34 = arith.mulf %31, %33 : vector<8x648xf32>
    %cst_17 = arith.constant dense<0.000000e+00> : vector<8xf32>
    %35 = vector.multi_reduction <add>, %34, %cst_17 [1] : vector<8x648xf32> to vector<8xf32>
    %36 = vector.shape_cast %35 : vector<8xf32> to vector<8x1xf32>
    %37 = arith.mulf %34, %31 : vector<8x648xf32>
    %cst_18 = arith.constant dense<0.000000e+00> : vector<8xf32>
    %38 = vector.multi_reduction <add>, %37, %cst_18 [1] : vector<8x648xf32> to vector<8xf32>
    %39 = vector.shape_cast %38 : vector<8xf32> to vector<8x1xf32>
    %cst_19 = arith.constant 0.001953125 : f32
    %40 = vector.broadcast %cst_19 : f32 to vector<8x1xf32>
    %41 = arith.mulf %36, %40 : vector<8x1xf32>
    %cst_20 = arith.constant 0.001953125 : f32
    %42 = vector.broadcast %cst_20 : f32 to vector<8x1xf32>
    %43 = arith.mulf %39, %42 : vector<8x1xf32>
    %44 = arith.mulf %41, %41 : vector<8x1xf32>
    %45 = arith.subf %43, %44 : vector<8x1xf32>
    %cst_21 = arith.constant 0.000000e+00 : f32
    %46 = vector.broadcast %cst_21 : f32 to vector<8x1xf32>
    %47 = arith.maximumf %45, %46 : vector<8x1xf32>
    %c0_22 = arith.constant 0 : index
    %c0_23 = arith.constant 0 : index
    %48 = vector.load %arg4[%c0_22, %c0_23] : memref<8x1xf32, #tpu.memory_space<vmem>>, vector<8x1xf32>
    %cst_24 = arith.constant 9.99999974E-6 : f32
    %49 = vector.broadcast %cst_24 : f32 to vector<8x1xf32>
    %50 = arith.addf %47, %49 : vector<8x1xf32>
    %51 = math.rsqrt %50 : vector<8x1xf32>
    %52 = arith.mulf %48, %51 : vector<8x1xf32>
    %c0_25 = arith.constant 0 : index
    %c0_26 = arith.constant 0 : index
    %53 = vector.load %arg5[%c0_25, %c0_26] : memref<8x1xf32, #tpu.memory_space<vmem>>, vector<8x1xf32>
    %54 = arith.mulf %41, %52 : vector<8x1xf32>
    %55 = arith.subf %53, %54 : vector<8x1xf32>
    %56 = vector.broadcast %52 : vector<8x1xf32> to vector<8x648xf32>
    %57 = arith.mulf %31, %56 : vector<8x648xf32>
    %58 = vector.broadcast %55 : vector<8x1xf32> to vector<8x648xf32>
    %59 = arith.addf %57, %58 : vector<8x648xf32>
    %cst_27 = arith.constant 0.000000e+00 : f32
    %60 = vector.broadcast %cst_27 : f32 to vector<8x648xf32>
    %61 = arith.maximumf %59, %60 : vector<8x648xf32>
    %62 = vector.extract_strided_slice %61 {offsets = [0, 1], sizes = [8, 647], strides = [1, 1]} : vector<8x648xf32> to vector<8x647xf32>
    %cst_28 = arith.constant 0.000000e+00 : f32
    %63 = vector.broadcast %cst_28 : f32 to vector<8x1xf32>
    %64 = tpu.concatenate %62, %63 in 1 : vector<8x647xf32>, vector<8x1xf32> -> vector<8x648xf32>
    %65 = arith.maximumf %61, %64 : vector<8x648xf32>
    %66 = vector.extract_strided_slice %65 {offsets = [0, 18], sizes = [8, 630], strides = [1, 1]} : vector<8x648xf32> to vector<8x630xf32>
    %cst_29 = arith.constant 0.000000e+00 : f32
    %67 = vector.broadcast %cst_29 : f32 to vector<8x18xf32>
    %68 = tpu.concatenate %66, %67 in 1 : vector<8x630xf32>, vector<8x18xf32> -> vector<8x648xf32>
    %69 = arith.maximumf %65, %68 : vector<8x648xf32>
    %c0_30 = arith.constant 0 : index
    %c0_31 = arith.constant 0 : index
    %70 = vector.load %arg7[%c0_30, %c0_31] : memref<8x8xf32, #tpu.memory_space<vmem>>, vector<8x8xf32>
    %71 = vector.broadcast %1 : vector<1x8xf32> to vector<8x8xf32>
    %72 = arith.mulf %70, %71 : vector<8x8xf32>
    %cst_32 = arith.constant dense<0.000000e+00> : vector<8xf32>
    %73 = vector.multi_reduction <add>, %72, %cst_32 [1] : vector<8x8xf32> to vector<8xf32>
    %74 = vector.shape_cast %73 : vector<8xf32> to vector<8x1xf32>
    %c0_33 = arith.constant 0 : index
    %c0_34 = arith.constant 0 : index
    %75 = vector.load %arg9[%c0_33, %c0_34] : memref<8x1xf32, #tpu.memory_space<vmem>>, vector<8x1xf32>
    %76 = arith.addf %74, %75 : vector<8x1xf32>
    %c0_35 = arith.constant 0 : index
    %c0_36 = arith.constant 0 : index
    %77 = vector.load %arg8[%c0_35, %c0_36] : memref<8x8xf32, #tpu.memory_space<vmem>>, vector<8x8xf32>
    %78 = vector.broadcast %1 : vector<1x8xf32> to vector<8x8xf32>
    %79 = arith.mulf %77, %78 : vector<8x8xf32>
    %cst_37 = arith.constant dense<0.000000e+00> : vector<8xf32>
    %80 = vector.multi_reduction <add>, %79, %cst_37 [1] : vector<8x8xf32> to vector<8xf32>
    %81 = vector.shape_cast %80 : vector<8xf32> to vector<8x1xf32>
    %c0_38 = arith.constant 0 : index
    %c0_39 = arith.constant 0 : index
    %82 = vector.load %arg10[%c0_38, %c0_39] : memref<8x1xf32, #tpu.memory_space<vmem>>, vector<8x1xf32>
    %83 = arith.addf %81, %82 : vector<8x1xf32>
    %84 = vector.broadcast %76 : vector<8x1xf32> to vector<8x648xf32>
    %85 = arith.mulf %84, %69 : vector<8x648xf32>
    %86 = vector.broadcast %83 : vector<8x1xf32> to vector<8x648xf32>
    %87 = arith.addf %85, %86 : vector<8x648xf32>
    %c0_40 = arith.constant 0 : index
    %c0_41 = arith.constant 0 : index
    %88 = vector.load %arg11[%c0_40, %c0_41] : memref<648x200xf32, #tpu.memory_space<vmem>>, vector<648x200xf32>
    %cst_42 = arith.constant dense<0.000000e+00> : vector<8x200xf32>
    %89 = tpu.matmul %87, %88, %cst_42 {dimension_numbers = #tpu.dot_dimension_numbers<[1], [0], [0], [1], [0, 0, 1, 1], [], []>} : vector<8x648xf32>, vector<648x200xf32>, vector<8x200xf32> -> vector<8x200xf32>
    %90 = vector.extract_strided_slice %89 {offsets = [0, 1], sizes = [8, 199], strides = [1, 1]} : vector<8x200xf32> to vector<8x199xf32>
    %cst_43 = arith.constant 0.000000e+00 : f32
    %91 = vector.broadcast %cst_43 : f32 to vector<8x1xf32>
    %92 = tpu.concatenate %90, %91 in 1 : vector<8x199xf32>, vector<8x1xf32> -> vector<8x200xf32>
    %93 = vector.extract_strided_slice %89 {offsets = [0, 2], sizes = [8, 198], strides = [1, 1]} : vector<8x200xf32> to vector<8x198xf32>
    %cst_44 = arith.constant 0.000000e+00 : f32
    %94 = vector.broadcast %cst_44 : f32 to vector<8x2xf32>
    %95 = tpu.concatenate %93, %94 in 1 : vector<8x198xf32>, vector<8x2xf32> -> vector<8x200xf32>
    %96 = vector.extract_strided_slice %89 {offsets = [0, 10], sizes = [8, 190], strides = [1, 1]} : vector<8x200xf32> to vector<8x190xf32>
    %cst_45 = arith.constant 0.000000e+00 : f32
    %97 = vector.broadcast %cst_45 : f32 to vector<8x10xf32>
    %98 = tpu.concatenate %96, %97 in 1 : vector<8x190xf32>, vector<8x10xf32> -> vector<8x200xf32>
    %99 = vector.extract_strided_slice %89 {offsets = [0, 11], sizes = [8, 189], strides = [1, 1]} : vector<8x200xf32> to vector<8x189xf32>
    %cst_46 = arith.constant 0.000000e+00 : f32
    %100 = vector.broadcast %cst_46 : f32 to vector<8x11xf32>
    %101 = tpu.concatenate %99, %100 in 1 : vector<8x189xf32>, vector<8x11xf32> -> vector<8x200xf32>
    %102 = vector.extract_strided_slice %89 {offsets = [0, 12], sizes = [8, 188], strides = [1, 1]} : vector<8x200xf32> to vector<8x188xf32>
    %cst_47 = arith.constant 0.000000e+00 : f32
    %103 = vector.broadcast %cst_47 : f32 to vector<8x12xf32>
    %104 = tpu.concatenate %102, %103 in 1 : vector<8x188xf32>, vector<8x12xf32> -> vector<8x200xf32>
    %105 = vector.extract_strided_slice %89 {offsets = [0, 20], sizes = [8, 180], strides = [1, 1]} : vector<8x200xf32> to vector<8x180xf32>
    %cst_48 = arith.constant 0.000000e+00 : f32
    %106 = vector.broadcast %cst_48 : f32 to vector<8x20xf32>
    %107 = tpu.concatenate %105, %106 in 1 : vector<8x180xf32>, vector<8x20xf32> -> vector<8x200xf32>
    %108 = vector.extract_strided_slice %89 {offsets = [0, 21], sizes = [8, 179], strides = [1, 1]} : vector<8x200xf32> to vector<8x179xf32>
    %cst_49 = arith.constant 0.000000e+00 : f32
    %109 = vector.broadcast %cst_49 : f32 to vector<8x21xf32>
    %110 = tpu.concatenate %108, %109 in 1 : vector<8x179xf32>, vector<8x21xf32> -> vector<8x200xf32>
    %111 = vector.extract_strided_slice %89 {offsets = [0, 22], sizes = [8, 178], strides = [1, 1]} : vector<8x200xf32> to vector<8x178xf32>
    %cst_50 = arith.constant 0.000000e+00 : f32
    %112 = vector.broadcast %cst_50 : f32 to vector<8x22xf32>
    %113 = tpu.concatenate %111, %112 in 1 : vector<8x178xf32>, vector<8x22xf32> -> vector<8x200xf32>
    %114 = tpu.concatenate %89, %92, %95, %98, %101, %104, %107, %110, %113 in 0 : vector<8x200xf32>, vector<8x200xf32>, vector<8x200xf32>, vector<8x200xf32>, vector<8x200xf32>, vector<8x200xf32>, vector<8x200xf32>, vector<8x200xf32>, vector<8x200xf32> -> vector<72x200xf32>
    %c0_51 = arith.constant 0 : index
    %c0_52 = arith.constant 0 : index
    %115 = vector.load %arg12[%c0_51, %c0_52] : memref<8x72xf32, #tpu.memory_space<vmem>>, vector<8x72xf32>
    %cst_53 = arith.constant dense<0.000000e+00> : vector<8x200xf32>
    %116 = tpu.matmul %115, %114, %cst_53 {dimension_numbers = #tpu.dot_dimension_numbers<[1], [0], [0], [1], [0, 0, 1, 1], [], []>} : vector<8x72xf32>, vector<72x200xf32>, vector<8x200xf32> -> vector<8x200xf32>
    %c0_54 = arith.constant 0 : index
    %c0_55 = arith.constant 0 : index
    %117 = vector.load %arg13[%c0_54, %c0_55] : memref<8x1xf32, #tpu.memory_space<vmem>>, vector<8x1xf32>
    %118 = vector.broadcast %117 : vector<8x1xf32> to vector<8x200xf32>
    %119 = arith.addf %116, %118 : vector<8x200xf32>
    %c0_56 = arith.constant 0 : index
    %c0_57 = arith.constant 0 : index
    %120 = vector.load %arg16[%c0_56, %c0_57] : memref<1x200xf32, #tpu.memory_space<vmem>>, vector<1x200xf32>
    %121 = vector.broadcast %120 : vector<1x200xf32> to vector<8x200xf32>
    %122 = arith.mulf %119, %121 : vector<8x200xf32>
    %cst_58 = arith.constant dense<0.000000e+00> : vector<8xf32>
    %123 = vector.multi_reduction <add>, %122, %cst_58 [1] : vector<8x200xf32> to vector<8xf32>
    %124 = vector.shape_cast %123 : vector<8xf32> to vector<8x1xf32>
    %125 = arith.mulf %122, %119 : vector<8x200xf32>
    %cst_59 = arith.constant dense<0.000000e+00> : vector<8xf32>
    %126 = vector.multi_reduction <add>, %125, %cst_59 [1] : vector<8x200xf32> to vector<8xf32>
    %127 = vector.shape_cast %126 : vector<8xf32> to vector<8x1xf32>
    %cst_60 = arith.constant 7.812500e-03 : f32
    %128 = vector.broadcast %cst_60 : f32 to vector<8x1xf32>
    %129 = arith.mulf %124, %128 : vector<8x1xf32>
    %cst_61 = arith.constant 7.812500e-03 : f32
    %130 = vector.broadcast %cst_61 : f32 to vector<8x1xf32>
    %131 = arith.mulf %127, %130 : vector<8x1xf32>
    %132 = arith.mulf %129, %129 : vector<8x1xf32>
    %133 = arith.subf %131, %132 : vector<8x1xf32>
    %cst_62 = arith.constant 0.000000e+00 : f32
    %134 = vector.broadcast %cst_62 : f32 to vector<8x1xf32>
    %135 = arith.maximumf %133, %134 : vector<8x1xf32>
    %c0_63 = arith.constant 0 : index
    %c0_64 = arith.constant 0 : index
    %136 = vector.load %arg14[%c0_63, %c0_64] : memref<8x1xf32, #tpu.memory_space<vmem>>, vector<8x1xf32>
    %cst_65 = arith.constant 9.99999974E-6 : f32
    %137 = vector.broadcast %cst_65 : f32 to vector<8x1xf32>
    %138 = arith.addf %135, %137 : vector<8x1xf32>
    %139 = math.rsqrt %138 : vector<8x1xf32>
    %140 = arith.mulf %136, %139 : vector<8x1xf32>
    %c0_66 = arith.constant 0 : index
    %c0_67 = arith.constant 0 : index
    %141 = vector.load %arg15[%c0_66, %c0_67] : memref<8x1xf32, #tpu.memory_space<vmem>>, vector<8x1xf32>
    %142 = arith.mulf %129, %140 : vector<8x1xf32>
    %143 = arith.subf %141, %142 : vector<8x1xf32>
    %144 = vector.broadcast %140 : vector<8x1xf32> to vector<8x200xf32>
    %145 = arith.mulf %119, %144 : vector<8x200xf32>
    %146 = vector.broadcast %143 : vector<8x1xf32> to vector<8x200xf32>
    %147 = arith.addf %145, %146 : vector<8x200xf32>
    %cst_68 = arith.constant 0.000000e+00 : f32
    %148 = vector.broadcast %cst_68 : f32 to vector<8x200xf32>
    %149 = arith.maximumf %147, %148 : vector<8x200xf32>
    %150 = vector.extract_strided_slice %149 {offsets = [0, 1], sizes = [8, 199], strides = [1, 1]} : vector<8x200xf32> to vector<8x199xf32>
    %cst_69 = arith.constant 0.000000e+00 : f32
    %151 = vector.broadcast %cst_69 : f32 to vector<8x1xf32>
    %152 = tpu.concatenate %150, %151 in 1 : vector<8x199xf32>, vector<8x1xf32> -> vector<8x200xf32>
    %153 = arith.maximumf %149, %152 : vector<8x200xf32>
    %154 = vector.extract_strided_slice %153 {offsets = [0, 10], sizes = [8, 190], strides = [1, 1]} : vector<8x200xf32> to vector<8x190xf32>
    %cst_70 = arith.constant 0.000000e+00 : f32
    %155 = vector.broadcast %cst_70 : f32 to vector<8x10xf32>
    %156 = tpu.concatenate %154, %155 in 1 : vector<8x190xf32>, vector<8x10xf32> -> vector<8x200xf32>
    %157 = arith.maximumf %153, %156 : vector<8x200xf32>
    %c0_71 = arith.constant 0 : index
    %c0_72 = arith.constant 0 : index
    %158 = vector.load %arg17[%c0_71, %c0_72] : memref<8x8xf32, #tpu.memory_space<vmem>>, vector<8x8xf32>
    %159 = vector.broadcast %1 : vector<1x8xf32> to vector<8x8xf32>
    %160 = arith.mulf %158, %159 : vector<8x8xf32>
    %cst_73 = arith.constant dense<0.000000e+00> : vector<8xf32>
    %161 = vector.multi_reduction <add>, %160, %cst_73 [1] : vector<8x8xf32> to vector<8xf32>
    %162 = vector.shape_cast %161 : vector<8xf32> to vector<8x1xf32>
    %c0_74 = arith.constant 0 : index
    %c0_75 = arith.constant 0 : index
    %163 = vector.load %arg19[%c0_74, %c0_75] : memref<8x1xf32, #tpu.memory_space<vmem>>, vector<8x1xf32>
    %164 = arith.addf %162, %163 : vector<8x1xf32>
    %c0_76 = arith.constant 0 : index
    %c0_77 = arith.constant 0 : index
    %165 = vector.load %arg18[%c0_76, %c0_77] : memref<8x8xf32, #tpu.memory_space<vmem>>, vector<8x8xf32>
    %166 = vector.broadcast %1 : vector<1x8xf32> to vector<8x8xf32>
    %167 = arith.mulf %165, %166 : vector<8x8xf32>
    %cst_78 = arith.constant dense<0.000000e+00> : vector<8xf32>
    %168 = vector.multi_reduction <add>, %167, %cst_78 [1] : vector<8x8xf32> to vector<8xf32>
    %169 = vector.shape_cast %168 : vector<8xf32> to vector<8x1xf32>
    %c0_79 = arith.constant 0 : index
    %c0_80 = arith.constant 0 : index
    %170 = vector.load %arg20[%c0_79, %c0_80] : memref<8x1xf32, #tpu.memory_space<vmem>>, vector<8x1xf32>
    %171 = arith.addf %169, %170 : vector<8x1xf32>
    %172 = vector.broadcast %164 : vector<8x1xf32> to vector<8x200xf32>
    %173 = arith.mulf %172, %157 : vector<8x200xf32>
    %174 = vector.broadcast %171 : vector<8x1xf32> to vector<8x200xf32>
    %175 = arith.addf %173, %174 : vector<8x200xf32>
    %c0_81 = arith.constant 0 : index
    %c0_82 = arith.constant 0 : index
    %176 = vector.load %arg21[%c0_81, %c0_82] : memref<200x32xf32, #tpu.memory_space<vmem>>, vector<200x32xf32>
    %cst_83 = arith.constant dense<0.000000e+00> : vector<8x32xf32>
    %177 = tpu.matmul %175, %176, %cst_83 {dimension_numbers = #tpu.dot_dimension_numbers<[1], [0], [0], [1], [0, 0, 1, 1], [], []>} : vector<8x200xf32>, vector<200x32xf32>, vector<8x32xf32> -> vector<8x32xf32>
    %178 = vector.extract_strided_slice %177 {offsets = [0, 0], sizes = [8, 2], strides = [1, 1]} : vector<8x32xf32> to vector<8x2xf32>
    %179 = vector.extract_strided_slice %177 {offsets = [0, 2], sizes = [8, 2], strides = [1, 1]} : vector<8x32xf32> to vector<8x2xf32>
    %180 = vector.extract_strided_slice %177 {offsets = [0, 4], sizes = [8, 2], strides = [1, 1]} : vector<8x32xf32> to vector<8x2xf32>
    %181 = vector.extract_strided_slice %177 {offsets = [0, 6], sizes = [8, 2], strides = [1, 1]} : vector<8x32xf32> to vector<8x2xf32>
    %182 = vector.extract_strided_slice %177 {offsets = [0, 8], sizes = [8, 2], strides = [1, 1]} : vector<8x32xf32> to vector<8x2xf32>
    %183 = vector.extract_strided_slice %177 {offsets = [0, 10], sizes = [8, 2], strides = [1, 1]} : vector<8x32xf32> to vector<8x2xf32>
    %184 = vector.extract_strided_slice %177 {offsets = [0, 12], sizes = [8, 2], strides = [1, 1]} : vector<8x32xf32> to vector<8x2xf32>
    %185 = vector.extract_strided_slice %177 {offsets = [0, 14], sizes = [8, 2], strides = [1, 1]} : vector<8x32xf32> to vector<8x2xf32>
    %186 = vector.extract_strided_slice %177 {offsets = [0, 16], sizes = [8, 2], strides = [1, 1]} : vector<8x32xf32> to vector<8x2xf32>
    %187 = vector.extract_strided_slice %177 {offsets = [0, 18], sizes = [8, 2], strides = [1, 1]} : vector<8x32xf32> to vector<8x2xf32>
    %188 = vector.extract_strided_slice %177 {offsets = [0, 20], sizes = [8, 2], strides = [1, 1]} : vector<8x32xf32> to vector<8x2xf32>
    %189 = vector.extract_strided_slice %177 {offsets = [0, 22], sizes = [8, 2], strides = [1, 1]} : vector<8x32xf32> to vector<8x2xf32>
    %190 = vector.extract_strided_slice %177 {offsets = [0, 24], sizes = [8, 2], strides = [1, 1]} : vector<8x32xf32> to vector<8x2xf32>
    %191 = vector.extract_strided_slice %177 {offsets = [0, 26], sizes = [8, 2], strides = [1, 1]} : vector<8x32xf32> to vector<8x2xf32>
    %192 = vector.extract_strided_slice %177 {offsets = [0, 28], sizes = [8, 2], strides = [1, 1]} : vector<8x32xf32> to vector<8x2xf32>
    %193 = vector.extract_strided_slice %177 {offsets = [0, 30], sizes = [8, 2], strides = [1, 1]} : vector<8x32xf32> to vector<8x2xf32>
    %194 = tpu.concatenate %178, %179, %180, %181, %182, %183, %184, %185, %186, %187, %188, %189, %190, %191, %192, %193 in 0 : vector<8x2xf32>, vector<8x2xf32>, vector<8x2xf32>, vector<8x2xf32>, vector<8x2xf32>, vector<8x2xf32>, vector<8x2xf32>, vector<8x2xf32>, vector<8x2xf32>, vector<8x2xf32>, vector<8x2xf32>, vector<8x2xf32>, vector<8x2xf32>, vector<8x2xf32>, vector<8x2xf32>, vector<8x2xf32> -> vector<128x2xf32>
    %c0_84 = arith.constant 0 : index
    %c0_85 = arith.constant 0 : index
    %195 = vector.load %arg22[%c0_84, %c0_85] : memref<5x128xf32, #tpu.memory_space<vmem>>, vector<5x128xf32>
    %cst_86 = arith.constant dense<0.000000e+00> : vector<5x2xf32>
    %196 = tpu.matmul %195, %194, %cst_86 {dimension_numbers = #tpu.dot_dimension_numbers<[1], [0], [0], [1], [0, 0, 1, 1], [], []>} : vector<5x128xf32>, vector<128x2xf32>, vector<5x2xf32> -> vector<5x2xf32>
    %c0_87 = arith.constant 0 : index
    %c0_88 = arith.constant 0 : index
    %197 = vector.load %arg23[%c0_87, %c0_88] : memref<5x1xf32, #tpu.memory_space<vmem>>, vector<5x1xf32>
    %198 = vector.broadcast %197 : vector<5x1xf32> to vector<5x2xf32>
    %199 = arith.addf %196, %198 : vector<5x2xf32>
    %c0_89 = arith.constant 0 : index
    %c0_90 = arith.constant 0 : index
    %200 = vector.load %arg24[%c0_89, %c0_90] : memref<5x2xf32, #tpu.memory_space<vmem>>, vector<5x2xf32>
    tpu.vector_store %arg24[%c0_89, %c0_90], %199 {strides = array<i32>} : memref<5x2xf32, #tpu.memory_space<vmem>>, vector<5x2xf32>,
    return
  }
}

</mosaic_0001>

<llo_original>
// kernel: _lambda_.1
$region0: #{_lambda_.1}
  #allocation0 [shape = 'u32[]', space=smem, size = 0x4, offset = 0x4, fixed_abs, tag = 'smem constant byte address 0x4 - core index']
  #allocation1 [shape = 'u32[144,128]{1,0:T(1,128)}', space=vmem, size = 0x12000, scoped, tag = 'internal scratch']
  %s0 = inlined_call_operand.vmem [shape: f32[4,648], index: 0, kind: input, shape index: {}]
  %s1 = inlined_call_operand.vmem [shape: f32[1,8], index: 1, kind: input, shape index: {}]
  %s2 = inlined_call_operand.vmem [shape: f32[8,36], index: 2, kind: input, shape index: {}]
  %s3 = inlined_call_operand.vmem [shape: f32[8,1], index: 3, kind: input, shape index: {}, may-alias: {3,5,13,15}]
  %s4 = inlined_call_operand.vmem [shape: f32[8,1], index: 4, kind: input, shape index: {}, may-alias: {4,14}]
  %s5 = inlined_call_operand.vmem [shape: f32[8,1], index: 5, kind: input, shape index: {}, may-alias: {3,5,13,15}]
  %s6 = inlined_call_operand.vmem [shape: f32[1,648], index: 6, kind: input, shape index: {}]
  %s7 = inlined_call_operand.vmem [shape: f32[8,8], index: 7, kind: input, shape index: {}]
  %s8 = inlined_call_operand.vmem [shape: f32[8,8], index: 8, kind: input, shape index: {}]
  %s9 = inlined_call_operand.vmem [shape: f32[8,1], index: 9, kind: input, shape index: {}]
  %s10 = inlined_call_operand.vmem [shape: f32[8,1], index: 10, kind: input, shape index: {}]
  %s11 = inlined_call_operand.hbm [shape: f32[648,200], index: 11, kind: input, shape index: {}]
  %s12 = inlined_call_operand.vmem [shape: f32[8,72], index: 12, kind: input, shape index: {}]
  %s13 = inlined_call_operand.vmem [shape: f32[8,1], index: 13, kind: input, shape index: {}, may-alias: {3,5,13,15}]
  %s14 = inlined_call_operand.vmem [shape: f32[8,1], index: 14, kind: input, shape index: {}, may-alias: {4,14}]
  %s15 = inlined_call_operand.vmem [shape: f32[8,1], index: 15, kind: input, shape index: {}, may-alias: {3,5,13,15}]
  %s16 = inlined_call_operand.vmem [shape: f32[1,200], index: 16, kind: input, shape index: {}]
  %s17 = inlined_call_operand.vmem [shape: f32[8,8], index: 17, kind: input, shape index: {}]
  %s18 = inlined_call_operand.vmem [shape: f32[8,8], index: 18, kind: input, shape index: {}]
  %s19 = inlined_call_operand.vmem [shape: f32[8,1], index: 19, kind: input, shape index: {}]
  %s20 = inlined_call_operand.vmem [shape: f32[8,1], index: 20, kind: input, shape index: {}]
  %s21 = inlined_call_operand.vmem [shape: f32[200,32], index: 21, kind: input, shape index: {}]
  %s22 = inlined_call_operand.vmem [shape: f32[5,128], index: 22, kind: input, shape index: {}]
  %s23 = inlined_call_operand.vmem [shape: f32[5,1], index: 23, kind: input, shape index: {}]
  %s24 = inlined_call_operand.vmem [shape: f32[5,2], index: 24, kind: output, shape index: {}]
  %s25 = sld [smem:[#allocation0]]
  $region110: #{_lambda_.1} parent=0
    _
  %s27 = ssub.s32 1, %s25
  %s28 = scalar_select 0, %s27, %s25
  $region1: #{_lambda_.1} parent=0
    #allocation2 [shape = 'u8[663552]{0}', space=vmem, size = 0xa2000, scoped, tag = 'input window, operand 11, single buffered']
    #allocation3 [shape = 's32[1]{0}', space=sflag, size = 0x4, scoped, tag = 'scoped memory for _lambda_.1']
    %29 = vsyncpa [#allocation3], 0
    // Predicated region
    $region2: #{_lambda_.1} parent=1 // pred_check
      _
    $region3: #{_lambda_.1} parent=1 // pred_check_branch
      %31 = sbr.rel (0) target = $region5
    $region4: #{_lambda_.1} parent=1 // pred_region
      _
    $region5: #{_lambda_.1} parent=1 // pred_fallthru
      _
    // Predicated region
    $region6: #{_lambda_.1} parent=1 // pred_check
      _
    $region7: #{_lambda_.1} parent=1 // pred_check_branch
      %33 = sbr.rel (0) target = $region9
    $region8: #{_lambda_.1} parent=1 // pred_region
      _
    $region9: #{_lambda_.1} parent=1 // pred_fallthru
      _
    // Predicated region
    $region10: #{_lambda_.1} parent=1 // pred_check
      _
    $region11: #{_lambda_.1} parent=1 // pred_check_branch
      %35 = sbr.rel (0) target = $region13
    $region12: #{_lambda_.1} parent=1 // pred_region
      _
    $region13: #{_lambda_.1} parent=1 // pred_fallthru
      _
    // Predicated region
    $region14: #{_lambda_.1} parent=1 // pred_check
      _
    $region15: #{_lambda_.1} parent=1 // pred_check_branch
      %37 = sbr.rel (0) target = $region17
    $region16: #{_lambda_.1} parent=1 // pred_region
      _
    $region17: #{_lambda_.1} parent=1 // pred_fallthru
      _
    // Predicated region
    $region18: #{_lambda_.1} parent=1 // pred_check
      _
    $region19: #{_lambda_.1} parent=1 // pred_check_branch
      %39 = sbr.rel (0) target = $region21
    $region20: #{_lambda_.1} parent=1 // pred_region
      _
    $region21: #{_lambda_.1} parent=1 // pred_fallthru
      _
    // Predicated region
    $region22: #{_lambda_.1} parent=1 // pred_check
      _
    $region23: #{_lambda_.1} parent=1 // pred_check_branch
      %41 = sbr.rel (0) target = $region25
    $region24: #{_lambda_.1} parent=1 // pred_region
      _
    $region25: #{_lambda_.1} parent=1 // pred_fallthru
      _
    // Predicated region
    $region26: #{_lambda_.1} parent=1 // pred_check
      _
    $region27: #{_lambda_.1} parent=1 // pred_check_branch
      %43 = sbr.rel (0) target = $region29
    $region28: #{_lambda_.1} parent=1 // pred_region
      _
    $region29: #{_lambda_.1} parent=1 // pred_fallthru
      _
    // Predicated region
    $region30: #{_lambda_.1} parent=1 // pred_check
      _
    $region31: #{_lambda_.1} parent=1 // pred_check_branch
      %45 = sbr.rel (0) target = $region33
    $region32: #{_lambda_.1} parent=1 // pred_region
      _
    $region33: #{_lambda_.1} parent=1 // pred_fallthru
      _
    // Predicated region
    $region34: #{_lambda_.1} parent=1 // pred_check
      _
    $region35: #{_lambda_.1} parent=1 // pred_check_branch
      %47 = sbr.rel (0) target = $region37
    $region36: #{_lambda_.1} parent=1 // pred_region
      _
    $region37: #{_lambda_.1} parent=1 // pred_fallthru
      _
    // Predicated region
    $region38: #{_lambda_.1} parent=1 // pred_check
      _
    $region39: #{_lambda_.1} parent=1 // pred_check_branch
      %49 = sbr.rel (0) target = $region41
    $region40: #{_lambda_.1} parent=1 // pred_region
      _
    $region41: #{_lambda_.1} parent=1 // pred_fallthru
      _
    // Predicated region
    $region42: #{_lambda_.1} parent=1 // pred_check
      _
    $region43: #{_lambda_.1} parent=1 // pred_check_branch
      %51 = sbr.rel (0) target = $region45
    $region44: #{_lambda_.1} parent=1 // pred_region
      _
    $region45: #{_lambda_.1} parent=1 // pred_fallthru
      _
    // Predicated region
    $region46: #{_lambda_.1} parent=1 // pred_check
      _
    $region47: #{_lambda_.1} parent=1 // pred_check_branch
      %53 = sbr.rel (0) target = $region49
    $region48: #{_lambda_.1} parent=1 // pred_region
      %s55 = ssub.s32 20736, 20736
      %56 = vsyncadd [#allocation3], %s55
      %s57 = sshll.u32 [#allocation2], 4
      %s58 = int_to_ptr.vmem [resolvable:$true] %s57
      %63 = dma.hbm_to_vmem [thread:$0]  %s11, 20736, %s58, [#allocation3], 256, 256, 16
    $region49: #{_lambda_.1} parent=1 // pred_fallthru
      _
    // Predicated region
    $region50: #{_lambda_.1} parent=1 // pred_check
      _
    $region51: #{_lambda_.1} parent=1 // pred_check_branch
      %65 = sbr.rel (0) target = $region53
    $region52: #{_lambda_.1} parent=1 // pred_region
      _
    $region53: #{_lambda_.1} parent=1 // pred_fallthru
      _
    // Predicated region
    $region54: #{_lambda_.1} parent=1 // pred_check
      _
    $region55: #{_lambda_.1} parent=1 // pred_check_branch
      %67 = sbr.rel (0) target = $region57
    $region56: #{_lambda_.1} parent=1 // pred_region
      _
    $region57: #{_lambda_.1} parent=1 // pred_fallthru
      _
    // Predicated region
    $region58: #{_lambda_.1} parent=1 // pred_check
      _
    $region59: #{_lambda_.1} parent=1 // pred_check_branch
      %69 = sbr.rel (0) target = $region61
    $region60: #{_lambda_.1} parent=1 // pred_region
      _
    $region61: #{_lambda_.1} parent=1 // pred_fallthru
      _
    // Predicated region
    $region62: #{_lambda_.1} parent=1 // pred_check
      _
    $region63: #{_lambda_.1} parent=1 // pred_check_branch
      %71 = sbr.rel (0) target = $region65
    $region64: #{_lambda_.1} parent=1 // pred_region
      _
    $region65: #{_lambda_.1} parent=1 // pred_fallthru
      _
    // Predicated region
    $region66: #{_lambda_.1} parent=1 // pred_check
      _
    $region67: #{_lambda_.1} parent=1 // pred_check_branch
      %73 = sbr.rel (0) target = $region69
    $region68: #{_lambda_.1} parent=1 // pred_region
      _
    $region69: #{_lambda_.1} parent=1 // pred_fallthru
      _
    // Predicated region
    $region70: #{_lambda_.1} parent=1 // pred_check
      _
    $region71: #{_lambda_.1} parent=1 // pred_check_branch
      %75 = sbr.rel (0) target = $region73
    $region72: #{_lambda_.1} parent=1 // pred_region
      _
    $region73: #{_lambda_.1} parent=1 // pred_fallthru
      _
    // Predicated region
    $region74: #{_lambda_.1} parent=1 // pred_check
      _
    $region75: #{_lambda_.1} parent=1 // pred_check_branch
      %77 = sbr.rel (0) target = $region77
    $region76: #{_lambda_.1} parent=1 // pred_region
      _
    $region77: #{_lambda_.1} parent=1 // pred_fallthru
      _
    // Predicated region
    $region78: #{_lambda_.1} parent=1 // pred_check
      _
    $region79: #{_lambda_.1} parent=1 // pred_check_branch
      %79 = sbr.rel (0) target = $region81
    $region80: #{_lambda_.1} parent=1 // pred_region
      _
    $region81: #{_lambda_.1} parent=1 // pred_fallthru
      _
    // Predicated region
    $region82: #{_lambda_.1} parent=1 // pred_check
      _
    $region83: #{_lambda_.1} parent=1 // pred_check_branch
      %81 = sbr.rel (0) target = $region85
    $region84: #{_lambda_.1} parent=1 // pred_region
      _
    $region85: #{_lambda_.1} parent=1 // pred_fallthru
      _
    // Predicated region
    $region86: #{_lambda_.1} parent=1 // pred_check
      _
    $region87: #{_lambda_.1} parent=1 // pred_check_branch
      %83 = sbr.rel (0) target = $region89
    $region88: #{_lambda_.1} parent=1 // pred_region
      _
    $region89: #{_lambda_.1} parent=1 // pred_fallthru
      _
    // Predicated region
    $region90: #{_lambda_.1} parent=1 // pred_check
      _
    $region91: #{_lambda_.1} parent=1 // pred_check_branch
      %85 = sbr.rel (0) target = $region93
    $region92: #{_lambda_.1} parent=1 // pred_region
      _
    $region93: #{_lambda_.1} parent=1 // pred_fallthru
      _
    // Predicated region
    $region94: #{_lambda_.1} parent=1 // pred_check
      _
    $region95: #{_lambda_.1} parent=1 // pred_check_branch
      %87 = sbr.rel (0) target = $region97
    $region96: #{_lambda_.1} parent=1 // pred_region
      _
    $region97: #{_lambda_.1} parent=1 // pred_fallthru
      _
    // Predicated region
    $region98: #{_lambda_.1} parent=1 // pred_check
      _
    $region99: #{_lambda_.1} parent=1 // pred_check_branch
      %89 = sbr.rel (0) target = $region101
    $region100: #{_lambda_.1} parent=1 // pred_region
      %90 = dma.done [#allocation3], 20736
    $region101: #{_lambda_.1} parent=1 // pred_fallthru
      _
    %v91 = vld [vmem:[%s0] sm:$0xff]
    %v92 = vld [vmem:[%s0 + $0x8] sm:$0xff]
    %v93 = vld [vmem:[%s0 + $0x10] sm:$0xff]
    %v94 = vld [vmem:[%s1] sm:$0x1]
    %v98 = vcombine.high %v91, %v91
    %v99 = vcombine.high %v92, %v92
    %v100 = vcombine.high %v93, %v93
    %101 = vrot.lane.b32.xlu0 %v91, 127
    %v102 = vpop.permute.xlu0 %101
    %103 = vrot.lane.b32.xlu0 %v98, 127
    %v104 = vpop.permute.xlu0 %103
    %105 = vrot.lane.b32.xlu0 %v92, 127
    %v106 = vpop.permute.xlu0 %105
    %107 = vrot.lane.b32.xlu0 %v99, 127
    %v108 = vpop.permute.xlu0 %107
    %109 = vrot.lane.b32.xlu0 %v93, 127
    %v110 = vpop.permute.xlu0 %109
    %111 = vrot.lane.b32.xlu0 %v100, 127
    %v112 = vpop.permute.xlu0 %111
    %vm113 = vcmask 1039360
    %v114 = vsel %vm113, %v102, %v104
    %v115 = vsel %vm113, %v104, %v106
    %v116 = vsel %vm113, %v106, %v108
    %v117 = vsel %vm113, %v108, %v110
    %v118 = vsel %vm113, %v110, %v112
    %vm120 = vcmask 56320
    %v121 = vsel %vm120, %v112, 0.0
    %122 = vrot.lane.b32.xlu0 %v91, 126
    %v123 = vpop.permute.xlu0 %122
    %124 = vrot.lane.b32.xlu0 %v98, 126
    %v125 = vpop.permute.xlu0 %124
    %126 = vrot.lane.b32.xlu0 %v92, 126
    %v127 = vpop.permute.xlu0 %126
    %128 = vrot.lane.b32.xlu0 %v99, 126
    %v129 = vpop.permute.xlu0 %128
    %130 = vrot.lane.b32.xlu0 %v93, 126
    %v131 = vpop.permute.xlu0 %130
    %132 = vrot.lane.b32.xlu0 %v100, 126
    %v133 = vpop.permute.xlu0 %132
    %vm134 = vcmask 1031168
    %v135 = vsel %vm134, %v123, %v125
    %v136 = vsel %vm134, %v125, %v127
    %v137 = vsel %vm134, %v127, %v129
    %v138 = vsel %vm134, %v129, %v131
    %v139 = vsel %vm134, %v131, %v133
    %vm146 = vcmask 48128
    %v147 = vsel %vm146, %v133, 0.0
    %148 = vrot.lane.b32.xlu0 %v91, 110
    %v149 = vpop.permute.xlu0 %148
    %150 = vrot.lane.b32.xlu0 %v98, 110
    %v151 = vpop.permute.xlu0 %150
    %152 = vrot.lane.b32.xlu0 %v92, 110
    %v153 = vpop.permute.xlu0 %152
    %154 = vrot.lane.b32.xlu0 %v99, 110
    %v155 = vpop.permute.xlu0 %154
    %156 = vrot.lane.b32.xlu0 %v93, 110
    %v157 = vpop.permute.xlu0 %156
    %158 = vrot.lane.b32.xlu0 %v100, 110
    %v159 = vpop.permute.xlu0 %158
    %vm160 = vcmask 900096
    %v161 = vsel %vm160, %v149, %v151
    %v162 = vsel %vm160, %v151, %v153
    %v163 = vsel %vm160, %v153, %v155
    %v164 = vsel %vm160, %v155, %v157
    %v165 = vsel %vm160, %v157, %v159
    %vm167 = vcmask 965632
    %v168 = vsel %vm167, %v165, 0.0
    %169 = vrot.lane.b32.xlu0 %v91, 109
    %v170 = vpop.permute.xlu0 %169
    %171 = vrot.lane.b32.xlu0 %v98, 109
    %v172 = vpop.permute.xlu0 %171
    %173 = vrot.lane.b32.xlu0 %v92, 109
    %v174 = vpop.permute.xlu0 %173
    %175 = vrot.lane.b32.xlu0 %v99, 109
    %v176 = vpop.permute.xlu0 %175
    %177 = vrot.lane.b32.xlu0 %v93, 109
    %v178 = vpop.permute.xlu0 %177
    %179 = vrot.lane.b32.xlu0 %v100, 109
    %v180 = vpop.permute.xlu0 %179
    %vm181 = vcmask 891904
    %v182 = vsel %vm181, %v170, %v172
    %v183 = vsel %vm181, %v172, %v174
    %v184 = vsel %vm181, %v174, %v176
    %v185 = vsel %vm181, %v176, %v178
    %v186 = vsel %vm181, %v178, %v180
    %vm192 = vcmask 957440
    %v193 = vsel %vm192, %v186, 0.0
    %194 = vrot.lane.b32.xlu0 %v91, 108
    %v195 = vpop.permute.xlu0 %194
    %196 = vrot.lane.b32.xlu0 %v98, 108
    %v197 = vpop.permute.xlu0 %196
    %198 = vrot.lane.b32.xlu0 %v92, 108
    %v199 = vpop.permute.xlu0 %198
    %200 = vrot.lane.b32.xlu0 %v99, 108
    %v201 = vpop.permute.xlu0 %200
    %202 = vrot.lane.b32.xlu0 %v93, 108
    %v203 = vpop.permute.xlu0 %202
    %204 = vrot.lane.b32.xlu0 %v100, 108
    %v205 = vpop.permute.xlu0 %204
    %vm206 = vcmask 883712
    %v207 = vsel %vm206, %v195, %v197
    %v208 = vsel %vm206, %v197, %v199
    %v209 = vsel %vm206, %v199, %v201
    %v210 = vsel %vm206, %v201, %v203
    %v211 = vsel %vm206, %v203, %v205
    %vm213 = vcmask 949248
    %v214 = vsel %vm213, %v211, 0.0
    %215 = vrot.lane.b32.xlu0 %v91, 92
    %v216 = vpop.permute.xlu0 %215
    %217 = vrot.lane.b32.xlu0 %v98, 92
    %v218 = vpop.permute.xlu0 %217
    %219 = vrot.lane.b32.xlu0 %v92, 92
    %v220 = vpop.permute.xlu0 %219
    %221 = vrot.lane.b32.xlu0 %v99, 92
    %v222 = vpop.permute.xlu0 %221
    %223 = vrot.lane.b32.xlu0 %v93, 92
    %v224 = vpop.permute.xlu0 %223
    %225 = vrot.lane.b32.xlu0 %v100, 92
    %v226 = vpop.permute.xlu0 %225
    %vm227 = vcmask 752640
    %v228 = vsel %vm227, %v216, %v218
    %v229 = vsel %vm227, %v218, %v220
    %v230 = vsel %vm227, %v220, %v222
    %v231 = vsel %vm227, %v222, %v224
    %v232 = vsel %vm227, %v224, %v226
    %vm238 = vcmask 818176
    %v239 = vsel %vm238, %v232, 0.0
    %240 = vrot.lane.b32.xlu0 %v91, 91
    %v241 = vpop.permute.xlu0 %240
    %242 = vrot.lane.b32.xlu0 %v98, 91
    %v243 = vpop.permute.xlu0 %242
    %244 = vrot.lane.b32.xlu0 %v92, 91
    %v245 = vpop.permute.xlu0 %244
    %246 = vrot.lane.b32.xlu0 %v99, 91
    %v247 = vpop.permute.xlu0 %246
    %248 = vrot.lane.b32.xlu0 %v93, 91
    %v249 = vpop.permute.xlu0 %248
    %250 = vrot.lane.b32.xlu0 %v100, 91
    %v251 = vpop.permute.xlu0 %250
    %vm252 = vcmask 744448
    %v253 = vsel %vm252, %v241, %v243
    %v254 = vsel %vm252, %v243, %v245
    %v255 = vsel %vm252, %v245, %v247
    %v256 = vsel %vm252, %v247, %v249
    %v257 = vsel %vm252, %v249, %v251
    %vm259 = vcmask 809984
    %v260 = vsel %vm259, %v257, 0.0
    %261 = vrot.lane.b32.xlu0 %v91, 90
    %v262 = vpop.permute.xlu0 %261
    %263 = vrot.lane.b32.xlu0 %v98, 90
    %v264 = vpop.permute.xlu0 %263
    %265 = vrot.lane.b32.xlu0 %v92, 90
    %v266 = vpop.permute.xlu0 %265
    %267 = vrot.lane.b32.xlu0 %v99, 90
    %v268 = vpop.permute.xlu0 %267
    %269 = vrot.lane.b32.xlu0 %v93, 90
    %v270 = vpop.permute.xlu0 %269
    %271 = vrot.lane.b32.xlu0 %v100, 90
    %v272 = vpop.permute.xlu0 %271
    %vm273 = vcmask 736256
    %v274 = vsel %vm273, %v262, %v264
    %v275 = vsel %vm273, %v264, %v266
    %v276 = vsel %vm273, %v266, %v268
    %v277 = vsel %vm273, %v268, %v270
    %v278 = vsel %vm273, %v270, %v272
    %vm280 = vcmask 801792
    %v281 = vsel %vm280, %v278, 0.0
    %v286 = vrot.slane %v114, 4
    %v287 = vrot.slane %v115, 4
    %v288 = vrot.slane %v116, 4
    %v289 = vrot.slane %v117, 4
    %v290 = vrot.slane %v118, 4
    %v291 = vrot.slane %v121, 4
    %v300 = vrot.slane %v161, 4
    %v301 = vrot.slane %v162, 4
    %v302 = vrot.slane %v163, 4
    %v303 = vrot.slane %v164, 4
    %v304 = vrot.slane %v168, 4
    %v305 = vrot.slane 0.0, 4
    %v313 = vrot.slane %v207, 4
    %v314 = vrot.slane %v208, 4
    %v315 = vrot.slane %v209, 4
    %v316 = vrot.slane %v210, 4
    %v317 = vrot.slane %v214, 4
    %v324 = vrot.slane %v253, 4
    %v325 = vrot.slane %v254, 4
    %v326 = vrot.slane %v255, 4
    %v327 = vrot.slane %v256, 4
    %v328 = vrot.slane %v260, 4
    %vm334 = vcmask 1043456
    %v335 = vsel %vm334, %v91, %v286
    %v336 = vsel %vm334, %v98, %v287
    %v337 = vsel %vm334, %v92, %v288
    %v338 = vsel %vm334, %v99, %v289
    %v339 = vsel %vm334, %v93, %v290
    %v340 = vsel %vm334, %v100, %v291
    %v341 = vsel %vm334, %v135, %v300
    %v342 = vsel %vm334, %v136, %v301
    %v343 = vsel %vm334, %v137, %v302
    %v344 = vsel %vm334, %v138, %v303
    %v345 = vsel %vm334, %v139, %v304
    %v346 = vsel %vm334, %v147, %v305
    %v347 = vsel %vm334, %v182, %v313
    %v348 = vsel %vm334, %v183, %v314
    %v349 = vsel %vm334, %v184, %v315
    %v350 = vsel %vm334, %v185, %v316
    %v351 = vsel %vm334, %v193, %v317
    %v352 = vsel %vm334, 0.0, %v305
    %v353 = vsel %vm334, %v228, %v324
    %v354 = vsel %vm334, %v229, %v325
    %v355 = vsel %vm334, %v230, %v326
    %v356 = vsel %vm334, %v231, %v327
    %v357 = vsel %vm334, %v239, %v328
    %v358 = vld [vmem:[%s2] sm:$0xff]
    %v359 = vld [vmem:[%s3] sm:$0xff]
    %361 = vset.pattern.permute.xlu0 0
    %362 = vperm.xlu0 %361, %v359
    %v363 = vpop.permute.xlu0 %362
    %vm365 = vcmask 293888
    %v367 = vsel %vm365, %v358, 0
    %v369 = vsel %vm334, %v274, 0
    %v371 = vsel %vm334, %v275, 0
    %v373 = vsel %vm334, %v276, 0
    %v375 = vsel %vm334, %v277, 0
    %v378 = vsel %vm334, %v281, 0
    %v380 = vsel %vm334, 0.0, 0
    %382 = vmatprep.subr.mxu0 0.0
    %383 = vmatpush1.msra.mxu0 0.0
    %384 = vmatprep.subr.mxu0 0.0
    %385 = vmatpush1.msra.mxu0 0.0
    %386 = vmatprep.subr.mxu0 0.0
    %387 = vmatpush1.msra.mxu0 0.0
    %388 = vmatprep.subr.mxu0 0.0
    %389 = vmatpush1.msra.mxu0 0.0
    %390 = vmatprep.subr.mxu0 0.0
    %391 = vmatpush1.msra.mxu0 0.0
    %392 = vmatprep.subr.mxu0 0.0
    %393 = vmatpush1.msra.mxu0 0.0
    %394 = vmatprep.subr.mxu0 0.0
    %395 = vmatpush1.msra.mxu0 0.0
    %396 = vmatprep.subr.mxu0 0.0
    %397 = vmatpush1.msra.mxu0 0.0
    %398 = vmatprep.subr.mxu0 0.0
    %399 = vmatpush1.msra.mxu0 0.0
    %400 = vmatprep.subr.mxu0 0.0
    %401 = vmatpush1.msra.mxu0 0.0
    %402 = vmatprep.subr.mxu0 0.0
    %403 = vmatpush1.msra.mxu0 0.0
    %404 = vmatprep.subr.mxu0 %v371
    %405 = vmatpush1.msra.mxu0 %v369
    %406 = vmatprep.subr.mxu0 %v354
    %407 = vmatpush1.msra.mxu0 %v353
    %408 = vmatprep.subr.mxu0 %v348
    %409 = vmatpush1.msra.mxu0 %v347
    %410 = vmatprep.subr.mxu0 %v342
    %411 = vmatpush1.msra.mxu0 %v341
    %412 = vmatprep.subr.mxu0 %v336
    %413 = vmatpush1.msra.mxu0 %v335
    %414 = vmatprep.subr.mxu0 0.0
    %415 = vmatpush2.msra.mxu0 0.0
    %416 = vmatprep.subr.mxu0 0.0
    %417 = vmatpush2.msra.mxu0 0.0
    %418 = vmatprep.subr.mxu0 0.0
    %419 = vmatpush2.msra.mxu0 0.0
    %420 = vmatprep.subr.mxu0 0.0
    %421 = vmatpush2.msra.mxu0 0.0
    %422 = vmatprep.subr.mxu0 0.0
    %423 = vmatpush2.msra.mxu0 0.0
    %424 = vmatprep.subr.mxu0 0.0
    %425 = vmatpush2.msra.mxu0 0.0
    %426 = vmatprep.subr.mxu0 0.0
    %427 = vmatpush2.msra.mxu0 0.0
    %428 = vmatprep.subr.mxu0 0.0
    %429 = vmatpush2.msra.mxu0 0.0
    %430 = vmatprep.subr.mxu0 0.0
    %431 = vmatpush2.msra.mxu0 0.0
    %432 = vmatprep.subr.mxu0 0.0
    %433 = vmatpush2.msra.mxu0 0.0
    %434 = vmatprep.subr.mxu0 0.0
    %435 = vmatpush2.msra.mxu0 0.0
    %436 = vmatprep.subr.mxu0 0.0
    %437 = vmatpush2.msra.mxu0 0.0
    %438 = vmatprep.subr.mxu0 0.0
    %439 = vmatpush2.msra.mxu0 0.0
    %440 = vmatprep.subr.mxu0 0.0
    %441 = vmatpush2.msra.mxu0 0.0
    %442 = vmatprep.subr.mxu0 0.0
    %443 = vmatpush2.msra.mxu0 0.0
    %444 = vmatprep.subr.mxu0 0.0
    %445 = vmatpush2.msra.mxu0 0.0
    %446 = vmatprep.mubr.f32.mxu0 0.0
    %447 = vmatmul.mubr.f32.gmra.mxu0 %v367
    %v448 = vpop.f32.mrf.mxu0
    %v449 = vadd.f32 %v363, %v448
    %v450 = vpop.f32.mrf.mxu0
    %v451 = vadd.f32 %v363, %v450
    %452 = vdwg.mxu0
    %453 = vmatprep.subr.mxu0 0.0
    %454 = vmatpush1.msra.mxu0 0.0
    %455 = vmatprep.subr.mxu0 0.0
    %456 = vmatpush1.msra.mxu0 0.0
    %457 = vmatprep.subr.mxu0 0.0
    %458 = vmatpush1.msra.mxu0 0.0
    %459 = vmatprep.subr.mxu0 0.0
    %460 = vmatpush1.msra.mxu0 0.0
    %461 = vmatprep.subr.mxu0 0.0
    %462 = vmatpush1.msra.mxu0 0.0
    %463 = vmatprep.subr.mxu0 0.0
    %464 = vmatpush1.msra.mxu0 0.0
    %465 = vmatprep.subr.mxu0 0.0
    %466 = vmatpush1.msra.mxu0 0.0
    %467 = vmatprep.subr.mxu0 0.0
    %468 = vmatpush1.msra.mxu0 0.0
    %469 = vmatprep.subr.mxu0 0.0
    %470 = vmatpush1.msra.mxu0 0.0
    %471 = vmatprep.subr.mxu0 0.0
    %472 = vmatpush1.msra.mxu0 0.0
    %473 = vmatprep.subr.mxu0 0.0
    %474 = vmatpush1.msra.mxu0 0.0
    %475 = vmatprep.subr.mxu0 %v375
    %476 = vmatpush1.msra.mxu0 %v373
    %477 = vmatprep.subr.mxu0 %v356
    %478 = vmatpush1.msra.mxu0 %v355
    %479 = vmatprep.subr.mxu0 %v350
    %480 = vmatpush1.msra.mxu0 %v349
    %481 = vmatprep.subr.mxu0 %v344
    %482 = vmatpush1.msra.mxu0 %v343
    %483 = vmatprep.subr.mxu0 %v338
    %484 = vmatpush1.msra.mxu0 %v337
    %485 = vmatprep.subr.mxu0 0.0
    %486 = vmatpush2.msra.mxu0 0.0
    %487 = vmatprep.subr.mxu0 0.0
    %488 = vmatpush2.msra.mxu0 0.0
    %489 = vmatprep.subr.mxu0 0.0
    %490 = vmatpush2.msra.mxu0 0.0
    %491 = vmatprep.subr.mxu0 0.0
    %492 = vmatpush2.msra.mxu0 0.0
    %493 = vmatprep.subr.mxu0 0.0
    %494 = vmatpush2.msra.mxu0 0.0
    %495 = vmatprep.subr.mxu0 0.0
    %496 = vmatpush2.msra.mxu0 0.0
    %497 = vmatprep.subr.mxu0 0.0
    %498 = vmatpush2.msra.mxu0 0.0
    %499 = vmatprep.subr.mxu0 0.0
    %500 = vmatpush2.msra.mxu0 0.0
    %501 = vmatprep.subr.mxu0 0.0
    %502 = vmatpush2.msra.mxu0 0.0
    %503 = vmatprep.subr.mxu0 0.0
    %504 = vmatpush2.msra.mxu0 0.0
    %505 = vmatprep.subr.mxu0 0.0
    %506 = vmatpush2.msra.mxu0 0.0
    %507 = vmatprep.subr.mxu0 0.0
    %508 = vmatpush2.msra.mxu0 0.0
    %509 = vmatprep.subr.mxu0 0.0
    %510 = vmatpush2.msra.mxu0 0.0
    %511 = vmatprep.subr.mxu0 0.0
    %512 = vmatpush2.msra.mxu0 0.0
    %513 = vmatprep.subr.mxu0 0.0
    %514 = vmatpush2.msra.mxu0 0.0
    %515 = vmatprep.subr.mxu0 0.0
    %516 = vmatpush2.msra.mxu0 0.0
    %517 = vmatprep.mubr.f32.mxu0 0.0
    %518 = vmatmul.mubr.f32.gmra.mxu0 %v367
    %v519 = vpop.f32.mrf.mxu0
    %v520 = vadd.f32 %v363, %v519
    %v521 = vpop.f32.mrf.mxu0
    %v522 = vadd.f32 %v363, %v521
    %523 = vdwg.mxu0
    %524 = vmatprep.subr.mxu0 0.0
    %525 = vmatpush1.msra.mxu0 0.0
    %526 = vmatprep.subr.mxu0 0.0
    %527 = vmatpush1.msra.mxu0 0.0
    %528 = vmatprep.subr.mxu0 0.0
    %529 = vmatpush1.msra.mxu0 0.0
    %530 = vmatprep.subr.mxu0 0.0
    %531 = vmatpush1.msra.mxu0 0.0
    %532 = vmatprep.subr.mxu0 0.0
    %533 = vmatpush1.msra.mxu0 0.0
    %534 = vmatprep.subr.mxu0 0.0
    %535 = vmatpush1.msra.mxu0 0.0
    %536 = vmatprep.subr.mxu0 0.0
    %537 = vmatpush1.msra.mxu0 0.0
    %538 = vmatprep.subr.mxu0 0.0
    %539 = vmatpush1.msra.mxu0 0.0
    %540 = vmatprep.subr.mxu0 0.0
    %541 = vmatpush1.msra.mxu0 0.0
    %542 = vmatprep.subr.mxu0 0.0
    %543 = vmatpush1.msra.mxu0 0.0
    %544 = vmatprep.subr.mxu0 0.0
    %545 = vmatpush1.msra.mxu0 0.0
    %546 = vmatprep.subr.mxu0 %v380
    %547 = vmatpush1.msra.mxu0 %v378
    %548 = vmatprep.subr.mxu0 %v352
    %549 = vmatpush1.msra.mxu0 %v357
    %550 = vmatprep.subr.mxu0 %v352
    %551 = vmatpush1.msra.mxu0 %v351
    %552 = vmatprep.subr.mxu0 %v346
    %553 = vmatpush1.msra.mxu0 %v345
    %554 = vmatprep.subr.mxu0 %v340
    %555 = vmatpush1.msra.mxu0 %v339
    %556 = vmatprep.subr.mxu0 0.0
    %557 = vmatpush2.msra.mxu0 0.0
    %558 = vmatprep.subr.mxu0 0.0
    %559 = vmatpush2.msra.mxu0 0.0
    %560 = vmatprep.subr.mxu0 0.0
    %561 = vmatpush2.msra.mxu0 0.0
    %562 = vmatprep.subr.mxu0 0.0
    %563 = vmatpush2.msra.mxu0 0.0
    %564 = vmatprep.subr.mxu0 0.0
    %565 = vmatpush2.msra.mxu0 0.0
    %566 = vmatprep.subr.mxu0 0.0
    %567 = vmatpush2.msra.mxu0 0.0
    %568 = vmatprep.subr.mxu0 0.0
    %569 = vmatpush2.msra.mxu0 0.0
    %570 = vmatprep.subr.mxu0 0.0
    %571 = vmatpush2.msra.mxu0 0.0
    %572 = vmatprep.subr.mxu0 0.0
    %573 = vmatpush2.msra.mxu0 0.0
    %574 = vmatprep.subr.mxu0 0.0
    %575 = vmatpush2.msra.mxu0 0.0
    %576 = vmatprep.subr.mxu0 0.0
    %577 = vmatpush2.msra.mxu0 0.0
    %578 = vmatprep.subr.mxu0 0.0
    %579 = vmatpush2.msra.mxu0 0.0
    %580 = vmatprep.subr.mxu0 0.0
    %581 = vmatpush2.msra.mxu0 0.0
    %582 = vmatprep.subr.mxu0 0.0
    %583 = vmatpush2.msra.mxu0 0.0
    %584 = vmatprep.subr.mxu0 0.0
    %585 = vmatpush2.msra.mxu0 0.0
    %586 = vmatprep.subr.mxu0 0.0
    %587 = vmatpush2.msra.mxu0 0.0
    %588 = vmatprep.mubr.f32.mxu0 0.0
    %589 = vmatmul.mubr.f32.gmra.mxu0 %v367
    %v590 = vpop.f32.mrf.mxu0
    %v591 = vadd.f32 %v363, %v590
    %v592 = vpop.f32.mrf.mxu0
    %v593 = vadd.f32 %v363, %v592
    %594 = vdwg.mxu0
    %v595 = vld [vmem:[%s6] sm:$0x3f]
    %v597 = vlaneseq
    %v598 = vshrl.u32 %v597, 7
    %v599 = vsub.s32 0, %v598
    %v600 = vrot.slane %v595, %v599
    %v601 = vlaneseq
    %v602 = vshrl.u32 %v601, 7
    %v603 = vsub.s32 1, %v602
    %v604 = vrot.slane %v595, %v603
    %v605 = vlaneseq
    %v606 = vshrl.u32 %v605, 7
    %v607 = vsub.s32 2, %v606
    %v608 = vrot.slane %v595, %v607
    %v609 = vlaneseq
    %v610 = vshrl.u32 %v609, 7
    %v611 = vsub.s32 3, %v610
    %v612 = vrot.slane %v595, %v611
    %v613 = vlaneseq
    %v614 = vshrl.u32 %v613, 7
    %v615 = vsub.s32 4, %v614
    %v616 = vrot.slane %v595, %v615
    %v617 = vlaneseq
    %v618 = vshrl.u32 %v617, 7
    %v619 = vsub.s32 5, %v618
    %v620 = vrot.slane %v595, %v619
    %v627 = vmul.f32 %v449, %v600
    %v628 = vmul.f32 %v451, %v604
    %v629 = vmul.f32 %v520, %v608
    %v630 = vmul.f32 %v522, %v612
    %v631 = vmul.f32 %v591, %v616
    %v632 = vmul.f32 %v593, %v620
    %v633 = vadd.f32 %v627, %v628
    %v634 = vadd.f32 %v633, %v629
    %v635 = vadd.f32 %v634, %v630
    %v636 = vadd.f32 %v635, %v631
    %vm637 = vcmask 64512
    %v638 = vsel %vm637, %v632, 0.0
    %v639 = vadd.f32 %v636, %v638
    %640 = vadd.xlane.f32.xlu0 %v639
    %v641 = vpop.xlane.xlu0 %640
    %v642 = vmul.f32 %v627, %v449
    %v643 = vmul.f32 %v628, %v451
    %v644 = vmul.f32 %v629, %v520
    %v645 = vmul.f32 %v630, %v522
    %v646 = vmul.f32 %v631, %v591
    %v647 = vmul.f32 %v632, %v593
    %v648 = vadd.f32 %v642, %v643
    %v649 = vadd.f32 %v648, %v644
    %v650 = vadd.f32 %v649, %v645
    %v651 = vadd.f32 %v650, %v646
    %v652 = vsel %vm637, %v647, 0.0
    %v653 = vadd.f32 %v651, %v652
    %654 = vadd.xlane.f32.xlu0 %v653
    %v655 = vpop.xlane.xlu0 %654
    %v656 = vmul.f32 %v641, 0.001953125
    %v657 = vmul.f32 %v655, 0.001953125
    %v658 = vmul.f32 %v656, %v656
    %v659 = vsub.f32 %v657, %v658
    %v660 = vmax.f32 %v659, 0.0
    %v661 = vld [vmem:[%s4] sm:$0xff]
    %v662 = vadd.f32 %v660, 1e-05
    %v663 = vrsqrt.pop %v662
    %v664 = vmul.f32 %v661, %v663
    %v665 = vld [vmem:[%s5] sm:$0xff]
    %v666 = vmul.f32 %v656, %v664
    %v667 = vsub.f32 %v665, %v666
    %669 = vset.pattern.permute.xlu0 0
    %670 = vperm.xlu0 %669, %v664
    %v671 = vpop.permute.xlu0 %670
    %v673 = vmul.f32 %v449, %v671
    %v674 = vmul.f32 %v451, %v671
    %v675 = vmul.f32 %v520, %v671
    %v676 = vmul.f32 %v522, %v671
    %v677 = vmul.f32 %v591, %v671
    %v678 = vmul.f32 %v593, %v671
    %680 = vset.pattern.permute.xlu0 0
    %681 = vperm.xlu0 %680, %v667
    %v682 = vpop.permute.xlu0 %681
    %v684 = vadd.f32 %v673, %v682
    %v685 = vadd.f32 %v674, %v682
    %v686 = vadd.f32 %v675, %v682
    %v687 = vadd.f32 %v676, %v682
    %v688 = vadd.f32 %v677, %v682
    %v689 = vadd.f32 %v678, %v682
    %v690 = vmax.f32 %v684, 0.0
    %v691 = vmax.f32 %v685, 0.0
    %v692 = vmax.f32 %v686, 0.0
    %v693 = vmax.f32 %v687, 0.0
    %v694 = vmax.f32 %v688, 0.0
    %v695 = vmax.f32 %v689, 0.0
    %702 = vrot.lane.b32.xlu0 %v690, 127
    %v703 = vpop.permute.xlu0 %702
    %704 = vrot.lane.b32.xlu0 %v691, 127
    %v705 = vpop.permute.xlu0 %704
    %706 = vrot.lane.b32.xlu0 %v692, 127
    %v707 = vpop.permute.xlu0 %706
    %708 = vrot.lane.b32.xlu0 %v693, 127
    %v709 = vpop.permute.xlu0 %708
    %710 = vrot.lane.b32.xlu0 %v694, 127
    %v711 = vpop.permute.xlu0 %710
    %712 = vrot.lane.b32.xlu0 %v695, 127
    %v713 = vpop.permute.xlu0 %712
    %v714 = vsel %vm113, %v703, %v705
    %v715 = vsel %vm113, %v705, %v707
    %v716 = vsel %vm113, %v707, %v709
    %v717 = vsel %vm113, %v709, %v711
    %v718 = vsel %vm113, %v711, %v713
    %v725 = vsel %vm120, %v713, 0.0
    %v726 = vmax.f32 %v690, %v714
    %v727 = vmax.f32 %v691, %v715
    %v728 = vmax.f32 %v692, %v716
    %v729 = vmax.f32 %v693, %v717
    %v730 = vmax.f32 %v694, %v718
    %v731 = vmax.f32 %v695, %v725
    %738 = vrot.lane.b32.xlu0 %v726, 110
    %v739 = vpop.permute.xlu0 %738
    %740 = vrot.lane.b32.xlu0 %v727, 110
    %v741 = vpop.permute.xlu0 %740
    %742 = vrot.lane.b32.xlu0 %v728, 110
    %v743 = vpop.permute.xlu0 %742
    %744 = vrot.lane.b32.xlu0 %v729, 110
    %v745 = vpop.permute.xlu0 %744
    %746 = vrot.lane.b32.xlu0 %v730, 110
    %v747 = vpop.permute.xlu0 %746
    %748 = vrot.lane.b32.xlu0 %v731, 110
    %v749 = vpop.permute.xlu0 %748
    %v750 = vsel %vm160, %v739, %v741
    %v751 = vsel %vm160, %v741, %v743
    %v752 = vsel %vm160, %v743, %v745
    %v753 = vsel %vm160, %v745, %v747
    %v754 = vsel %vm160, %v747, %v749
    %v760 = vsel %vm167, %v754, 0.0
    %v761 = vmax.f32 %v726, %v750
    %v762 = vmax.f32 %v727, %v751
    %v763 = vmax.f32 %v728, %v752
    %v764 = vmax.f32 %v729, %v753
    %v765 = vmax.f32 %v730, %v760
    %v766 = vmax.f32 %v731, 0.0
    %v767 = vld [vmem:[%s7] sm:$0xff]
    %v769 = vlaneseq
    %v770 = vshrl.u32 %v769, 7
    %v771 = vsub.s32 0, %v770
    %v772 = vrot.slane %v94, %v771
    %v774 = vmul.f32 %v767, %v772
    %v775 = vsel %vm637, %v774, 0.0
    %776 = vadd.xlane.f32.xlu0 %v775
    %v777 = vpop.xlane.xlu0 %776
    %v778 = vld [vmem:[%s9] sm:$0xff]
    %v779 = vadd.f32 %v777, %v778
    %v780 = vld [vmem:[%s8] sm:$0xff]
    %v781 = vmul.f32 %v780, %v772
    %v782 = vsel %vm637, %v781, 0.0
    %783 = vadd.xlane.f32.xlu0 %v782
    %v784 = vpop.xlane.xlu0 %783
    %v785 = vld [vmem:[%s10] sm:$0xff]
    %v786 = vadd.f32 %v784, %v785
    %788 = vset.pattern.permute.xlu0 0
    %789 = vperm.xlu0 %788, %v779
    %v790 = vpop.permute.xlu0 %789
    %v792 = vmul.f32 %v790, %v761
    %v793 = vmul.f32 %v790, %v762
    %v794 = vmul.f32 %v790, %v763
    %v795 = vmul.f32 %v790, %v764
    %v796 = vmul.f32 %v790, %v765
    %v797 = vmul.f32 %v790, %v766
    %799 = vset.pattern.permute.xlu0 0
    %800 = vperm.xlu0 %799, %v786
    %v801 = vpop.permute.xlu0 %800
    %v803 = vadd.f32 %v792, %v801
    %v804 = vadd.f32 %v793, %v801
    %v805 = vadd.f32 %v794, %v801
    %v806 = vadd.f32 %v795, %v801
    %v807 = vadd.f32 %v796, %v801
    %v808 = vadd.f32 %v797, %v801
    %v809 = vld [vmem:[#allocation2] sm:$0xff]
    %v810 = vld [vmem:[#allocation2 + $0x8] sm:$0xff]
    %v811 = vld [vmem:[#allocation2 + $0x10] sm:$0xff]
    %v812 = vld [vmem:[#allocation2 + $0x18] sm:$0xff]
    %v813 = vld [vmem:[#allocation2 + $0x20] sm:$0xff]
    %v814 = vld [vmem:[#allocation2 + $0x28] sm:$0xff]
    %v815 = vld [vmem:[#allocation2 + $0x30] sm:$0xff]
    %v816 = vld [vmem:[#allocation2 + $0x38] sm:$0xff]
    %v817 = vld [vmem:[#allocation2 + $0x40] sm:$0xff]
    %v818 = vld [vmem:[#allocation2 + $0x48] sm:$0xff]
    %v819 = vld [vmem:[#allocation2 + $0x50] sm:$0xff]
    %v820 = vld [vmem:[#allocation2 + $0x58] sm:$0xff]
    %v821 = vld [vmem:[#allocation2 + $0x60] sm:$0xff]
    %v822 = vld [vmem:[#allocation2 + $0x68] sm:$0xff]
    %v823 = vld [vmem:[#allocation2 + $0x70] sm:$0xff]
    %v824 = vld [vmem:[#allocation2 + $0x78] sm:$0xff]
    %v825 = vld [vmem:[#allocation2 + $0x80] sm:$0xff]
    %v826 = vld [vmem:[#allocation2 + $0x88] sm:$0xff]
    %v827 = vld [vmem:[#allocation2 + $0x90] sm:$0xff]
    %v828 = vld [vmem:[#allocation2 + $0x98] sm:$0xff]
    %v829 = vld [vmem:[#allocation2 + $0xa0] sm:$0xff]
    %v830 = vld [vmem:[#allocation2 + $0xa8] sm:$0xff]
    %v831 = vld [vmem:[#allocation2 + $0xb0] sm:$0xff]
    %v832 = vld [vmem:[#allocation2 + $0xb8] sm:$0xff]
    %v833 = vld [vmem:[#allocation2 + $0xc0] sm:$0xff]
    %v834 = vld [vmem:[#allocation2 + $0xc8] sm:$0xff]
    %v835 = vld [vmem:[#allocation2 + $0xd0] sm:$0xff]
    %v836 = vld [vmem:[#allocation2 + $0xd8] sm:$0xff]
    %v837 = vld [vmem:[#allocation2 + $0xe0] sm:$0xff]
    %v838 = vld [vmem:[#allocation2 + $0xe8] sm:$0xff]
    %v839 = vld [vmem:[#allocation2 + $0xf0] sm:$0xff]
    %v840 = vld [vmem:[#allocation2 + $0xf8] sm:$0xff]
    %v841 = vld [vmem:[#allocation2 + $0x100] sm:$0xff]
    %v842 = vld [vmem:[#allocation2 + $0x108] sm:$0xff]
    %v843 = vld [vmem:[#allocation2 + $0x110] sm:$0xff]
    %v844 = vld [vmem:[#allocation2 + $0x118] sm:$0xff]
    %v845 = vld [vmem:[#allocation2 + $0x120] sm:$0xff]
    %v846 = vld [vmem:[#allocation2 + $0x128] sm:$0xff]
    %v847 = vld [vmem:[#allocation2 + $0x130] sm:$0xff]
    %v848 = vld [vmem:[#allocation2 + $0x138] sm:$0xff]
    %v849 = vld [vmem:[#allocation2 + $0x140] sm:$0xff]
    %v850 = vld [vmem:[#allocation2 + $0x148] sm:$0xff]
    %v851 = vld [vmem:[#allocation2 + $0x150] sm:$0xff]
    %v852 = vld [vmem:[#allocation2 + $0x158] sm:$0xff]
    %v853 = vld [vmem:[#allocation2 + $0x160] sm:$0xff]
    %v854 = vld [vmem:[#allocation2 + $0x168] sm:$0xff]
    %v855 = vld [vmem:[#allocation2 + $0x170] sm:$0xff]
    %v856 = vld [vmem:[#allocation2 + $0x178] sm:$0xff]
    %v857 = vld [vmem:[#allocation2 + $0x180] sm:$0xff]
    %v858 = vld [vmem:[#allocation2 + $0x188] sm:$0xff]
    %v859 = vld [vmem:[#allocation2 + $0x190] sm:$0xff]
    %v860 = vld [vmem:[#allocation2 + $0x198] sm:$0xff]
    %v861 = vld [vmem:[#allocation2 + $0x1a0] sm:$0xff]
    %v862 = vld [vmem:[#allocation2 + $0x1a8] sm:$0xff]
    %v863 = vld [vmem:[#allocation2 + $0x1b0] sm:$0xff]
    %v864 = vld [vmem:[#allocation2 + $0x1b8] sm:$0xff]
    %v865 = vld [vmem:[#allocation2 + $0x1c0] sm:$0xff]
    %v866 = vld [vmem:[#allocation2 + $0x1c8] sm:$0xff]
    %v867 = vld [vmem:[#allocation2 + $0x1d0] sm:$0xff]
    %v868 = vld [vmem:[#allocation2 + $0x1d8] sm:$0xff]
    %v869 = vld [vmem:[#allocation2 + $0x1e0] sm:$0xff]
    %v870 = vld [vmem:[#allocation2 + $0x1e8] sm:$0xff]
    %v871 = vld [vmem:[#allocation2 + $0x1f0] sm:$0xff]
    %v872 = vld [vmem:[#allocation2 + $0x1f8] sm:$0xff]
    %v873 = vld [vmem:[#allocation2 + $0x200] sm:$0xff]
    %v874 = vld [vmem:[#allocation2 + $0x208] sm:$0xff]
    %v875 = vld [vmem:[#allocation2 + $0x210] sm:$0xff]
    %v876 = vld [vmem:[#allocation2 + $0x218] sm:$0xff]
    %v877 = vld [vmem:[#allocation2 + $0x220] sm:$0xff]
    %v878 = vld [vmem:[#allocation2 + $0x228] sm:$0xff]
    %v879 = vld [vmem:[#allocation2 + $0x230] sm:$0xff]
    %v880 = vld [vmem:[#allocation2 + $0x238] sm:$0xff]
    %v881 = vld [vmem:[#allocation2 + $0x240] sm:$0xff]
    %v882 = vld [vmem:[#allocation2 + $0x248] sm:$0xff]
    %v883 = vld [vmem:[#allocation2 + $0x250] sm:$0xff]
    %v884 = vld [vmem:[#allocation2 + $0x258] sm:$0xff]
    %v885 = vld [vmem:[#allocation2 + $0x260] sm:$0xff]
    %v886 = vld [vmem:[#allocation2 + $0x268] sm:$0xff]
    %v887 = vld [vmem:[#allocation2 + $0x270] sm:$0xff]
    %v888 = vld [vmem:[#allocation2 + $0x278] sm:$0xff]
    %v889 = vld [vmem:[#allocation2 + $0x280] sm:$0xff]
    %v890 = vld [vmem:[#allocation2 + $0x288] sm:$0xff]
    %v891 = vld [vmem:[#allocation2 + $0x290] sm:$0xff]
    %v892 = vld [vmem:[#allocation2 + $0x298] sm:$0xff]
    %v893 = vld [vmem:[#allocation2 + $0x2a0] sm:$0xff]
    %v894 = vld [vmem:[#allocation2 + $0x2a8] sm:$0xff]
    %v895 = vld [vmem:[#allocation2 + $0x2b0] sm:$0xff]
    %v896 = vld [vmem:[#allocation2 + $0x2b8] sm:$0xff]
    %v897 = vld [vmem:[#allocation2 + $0x2c0] sm:$0xff]
    %v898 = vld [vmem:[#allocation2 + $0x2c8] sm:$0xff]
    %v899 = vld [vmem:[#allocation2 + $0x2d0] sm:$0xff]
    %v900 = vld [vmem:[#allocation2 + $0x2d8] sm:$0xff]
    %v901 = vld [vmem:[#allocation2 + $0x2e0] sm:$0xff]
    %v902 = vld [vmem:[#allocation2 + $0x2e8] sm:$0xff]
    %v903 = vld [vmem:[#allocation2 + $0x2f0] sm:$0xff]
    %v904 = vld [vmem:[#allocation2 + $0x2f8] sm:$0xff]
    %v905 = vld [vmem:[#allocation2 + $0x300] sm:$0xff]
    %v906 = vld [vmem:[#allocation2 + $0x308] sm:$0xff]
    %v907 = vld [vmem:[#allocation2 + $0x310] sm:$0xff]
    %v908 = vld [vmem:[#allocation2 + $0x318] sm:$0xff]
    %v909 = vld [vmem:[#allocation2 + $0x320] sm:$0xff]
    %v910 = vld [vmem:[#allocation2 + $0x328] sm:$0xff]
    %v911 = vld [vmem:[#allocation2 + $0x330] sm:$0xff]
    %v912 = vld [vmem:[#allocation2 + $0x338] sm:$0xff]
    %v913 = vld [vmem:[#allocation2 + $0x340] sm:$0xff]
    %v914 = vld [vmem:[#allocation2 + $0x348] sm:$0xff]
    %v915 = vld [vmem:[#allocation2 + $0x350] sm:$0xff]
    %v916 = vld [vmem:[#allocation2 + $0x358] sm:$0xff]
    %v917 = vld [vmem:[#allocation2 + $0x360] sm:$0xff]
    %v918 = vld [vmem:[#allocation2 + $0x368] sm:$0xff]
    %v919 = vld [vmem:[#allocation2 + $0x370] sm:$0xff]
    %v920 = vld [vmem:[#allocation2 + $0x378] sm:$0xff]
    %v921 = vld [vmem:[#allocation2 + $0x380] sm:$0xff]
    %v922 = vld [vmem:[#allocation2 + $0x388] sm:$0xff]
    %v923 = vld [vmem:[#allocation2 + $0x390] sm:$0xff]
    %v924 = vld [vmem:[#allocation2 + $0x398] sm:$0xff]
    %v925 = vld [vmem:[#allocation2 + $0x3a0] sm:$0xff]
    %v926 = vld [vmem:[#allocation2 + $0x3a8] sm:$0xff]
    %v927 = vld [vmem:[#allocation2 + $0x3b0] sm:$0xff]
    %v928 = vld [vmem:[#allocation2 + $0x3b8] sm:$0xff]
    %v929 = vld [vmem:[#allocation2 + $0x3c0] sm:$0xff]
    %v930 = vld [vmem:[#allocation2 + $0x3c8] sm:$0xff]
    %v931 = vld [vmem:[#allocation2 + $0x3d0] sm:$0xff]
    %v932 = vld [vmem:[#allocation2 + $0x3d8] sm:$0xff]
    %v933 = vld [vmem:[#allocation2 + $0x3e0] sm:$0xff]
    %v934 = vld [vmem:[#allocation2 + $0x3e8] sm:$0xff]
    %v935 = vld [vmem:[#allocation2 + $0x3f0] sm:$0xff]
    %v936 = vld [vmem:[#allocation2 + $0x3f8] sm:$0xff]
    %v937 = vld [vmem:[#allocation2 + $0x400] sm:$0xff]
    %v938 = vld [vmem:[#allocation2 + $0x408] sm:$0xff]
    %v939 = vld [vmem:[#allocation2 + $0x410] sm:$0xff]
    %v940 = vld [vmem:[#allocation2 + $0x418] sm:$0xff]
    %v941 = vld [vmem:[#allocation2 + $0x420] sm:$0xff]
    %v942 = vld [vmem:[#allocation2 + $0x428] sm:$0xff]
    %v943 = vld [vmem:[#allocation2 + $0x430] sm:$0xff]
    %v944 = vld [vmem:[#allocation2 + $0x438] sm:$0xff]
    %v945 = vld [vmem:[#allocation2 + $0x440] sm:$0xff]
    %v946 = vld [vmem:[#allocation2 + $0x448] sm:$0xff]
    %v947 = vld [vmem:[#allocation2 + $0x450] sm:$0xff]
    %v948 = vld [vmem:[#allocation2 + $0x458] sm:$0xff]
    %v949 = vld [vmem:[#allocation2 + $0x460] sm:$0xff]
    %v950 = vld [vmem:[#allocation2 + $0x468] sm:$0xff]
    %v951 = vld [vmem:[#allocation2 + $0x470] sm:$0xff]
    %v952 = vld [vmem:[#allocation2 + $0x478] sm:$0xff]
    %v953 = vld [vmem:[#allocation2 + $0x480] sm:$0xff]
    %v954 = vld [vmem:[#allocation2 + $0x488] sm:$0xff]
    %v955 = vld [vmem:[#allocation2 + $0x490] sm:$0xff]
    %v956 = vld [vmem:[#allocation2 + $0x498] sm:$0xff]
    %v957 = vld [vmem:[#allocation2 + $0x4a0] sm:$0xff]
    %v958 = vld [vmem:[#allocation2 + $0x4a8] sm:$0xff]
    %v959 = vld [vmem:[#allocation2 + $0x4b0] sm:$0xff]
    %v960 = vld [vmem:[#allocation2 + $0x4b8] sm:$0xff]
    %v961 = vld [vmem:[#allocation2 + $0x4c0] sm:$0xff]
    %v962 = vld [vmem:[#allocation2 + $0x4c8] sm:$0xff]
    %v963 = vld [vmem:[#allocation2 + $0x4d0] sm:$0xff]
    %v964 = vld [vmem:[#allocation2 + $0x4d8] sm:$0xff]
    %v965 = vld [vmem:[#allocation2 + $0x4e0] sm:$0xff]
    %v966 = vld [vmem:[#allocation2 + $0x4e8] sm:$0xff]
    %v967 = vld [vmem:[#allocation2 + $0x4f0] sm:$0xff]
    %v968 = vld [vmem:[#allocation2 + $0x4f8] sm:$0xff]
    %v969 = vld [vmem:[#allocation2 + $0x500] sm:$0xff]
    %v970 = vld [vmem:[#allocation2 + $0x508] sm:$0xff]
    %v972 = vsel %vm637, %v808, 0
    %974 = vmatprep.subr.mxu0 %v840
    %975 = vmatpush1.msra.mxu0 %v839
    %976 = vmatprep.subr.mxu0 %v838
    %977 = vmatpush1.msra.mxu0 %v837
    %978 = vmatprep.subr.mxu0 %v836
    %979 = vmatpush1.msra.mxu0 %v835
    %980 = vmatprep.subr.mxu0 %v834
    %981 = vmatpush1.msra.mxu0 %v833
    %982 = vmatprep.subr.mxu0 %v832
    %983 = vmatpush1.msra.mxu0 %v831
    %984 = vmatprep.subr.mxu0 %v830
    %985 = vmatpush1.msra.mxu0 %v829
    %986 = vmatprep.subr.mxu0 %v828
    %987 = vmatpush1.msra.mxu0 %v827
    %988 = vmatprep.subr.mxu0 %v826
    %989 = vmatpush1.msra.mxu0 %v825
    %990 = vmatprep.subr.mxu0 %v824
    %991 = vmatpush1.msra.mxu0 %v823
    %992 = vmatprep.subr.mxu0 %v822
    %993 = vmatpush1.msra.mxu0 %v821
    %994 = vmatprep.subr.mxu0 %v820
    %995 = vmatpush1.msra.mxu0 %v819
    %996 = vmatprep.subr.mxu0 %v818
    %997 = vmatpush1.msra.mxu0 %v817
    %998 = vmatprep.subr.mxu0 %v816
    %999 = vmatpush1.msra.mxu0 %v815
    %1000 = vmatprep.subr.mxu0 %v814
    %1001 = vmatpush1.msra.mxu0 %v813
    %1002 = vmatprep.subr.mxu0 %v812
    %1003 = vmatpush1.msra.mxu0 %v811
    %1004 = vmatprep.subr.mxu0 %v810
    %1005 = vmatpush1.msra.mxu0 %v809
    %1006 = vmatprep.subr.mxu0 %v872
    %1007 = vmatpush2.msra.mxu0 %v871
    %1008 = vmatprep.subr.mxu0 %v870
    %1009 = vmatpush2.msra.mxu0 %v869
    %1010 = vmatprep.subr.mxu0 %v868
    %1011 = vmatpush2.msra.mxu0 %v867
    %1012 = vmatprep.subr.mxu0 %v866
    %1013 = vmatpush2.msra.mxu0 %v865
    %1014 = vmatprep.subr.mxu0 %v864
    %1015 = vmatpush2.msra.mxu0 %v863
    %1016 = vmatprep.subr.mxu0 %v862
    %1017 = vmatpush2.msra.mxu0 %v861
    %1018 = vmatprep.subr.mxu0 %v860
    %1019 = vmatpush2.msra.mxu0 %v859
    %1020 = vmatprep.subr.mxu0 %v858
    %1021 = vmatpush2.msra.mxu0 %v857
    %1022 = vmatprep.subr.mxu0 %v856
    %1023 = vmatpush2.msra.mxu0 %v855
    %1024 = vmatprep.subr.mxu0 %v854
    %1025 = vmatpush2.msra.mxu0 %v853
    %1026 = vmatprep.subr.mxu0 %v852
    %1027 = vmatpush2.msra.mxu0 %v851
    %1028 = vmatprep.subr.mxu0 %v850
    %1029 = vmatpush2.msra.mxu0 %v849
    %1030 = vmatprep.subr.mxu0 %v848
    %1031 = vmatpush2.msra.mxu0 %v847
    %1032 = vmatprep.subr.mxu0 %v846
    %1033 = vmatpush2.msra.mxu0 %v845
    %1034 = vmatprep.subr.mxu0 %v844
    %1035 = vmatpush2.msra.mxu0 %v843
    %1036 = vmatprep.subr.mxu0 %v842
    %1037 = vmatpush2.msra.mxu0 %v841
    %1038 = vmatprep.mubr.f32.mxu0 %v804
    %1039 = vmatmul.mubr.f32.gmra.mxu0 %v803
    %v1040 = vpop.f32.mrf.mxu0
    %v1041 = vadd.f32 0.0, %v1040
    %v1042 = vpop.f32.mrf.mxu0
    %v1043 = vadd.f32 0.0, %v1042
    %1044 = vdwg.mxu0
    %1045 = vmatprep.subr.mxu0 %v904
    %1046 = vmatpush1.msra.mxu0 %v903
    %1047 = vmatprep.subr.mxu0 %v902
    %1048 = vmatpush1.msra.mxu0 %v901
    %1049 = vmatprep.subr.mxu0 %v900
    %1050 = vmatpush1.msra.mxu0 %v899
    %1051 = vmatprep.subr.mxu0 %v898
    %1052 = vmatpush1.msra.mxu0 %v897
    %1053 = vmatprep.subr.mxu0 %v896
    %1054 = vmatpush1.msra.mxu0 %v895
    %1055 = vmatprep.subr.mxu0 %v894
    %1056 = vmatpush1.msra.mxu0 %v893
    %1057 = vmatprep.subr.mxu0 %v892
    %1058 = vmatpush1.msra.mxu0 %v891
    %1059 = vmatprep.subr.mxu0 %v890
    %1060 = vmatpush1.msra.mxu0 %v889
    %1061 = vmatprep.subr.mxu0 %v888
    %1062 = vmatpush1.msra.mxu0 %v887
    %1063 = vmatprep.subr.mxu0 %v886
    %1064 = vmatpush1.msra.mxu0 %v885
    %1065 = vmatprep.subr.mxu0 %v884
    %1066 = vmatpush1.msra.mxu0 %v883
    %1067 = vmatprep.subr.mxu0 %v882
    %1068 = vmatpush1.msra.mxu0 %v881
    %1069 = vmatprep.subr.mxu0 %v880
    %1070 = vmatpush1.msra.mxu0 %v879
    %1071 = vmatprep.subr.mxu0 %v878
    %1072 = vmatpush1.msra.mxu0 %v877
    %1073 = vmatprep.subr.mxu0 %v876
    %1074 = vmatpush1.msra.mxu0 %v875
    %1075 = vmatprep.subr.mxu0 %v874
    %1076 = vmatpush1.msra.mxu0 %v873
    %1077 = vmatprep.subr.mxu0 %v936
    %1078 = vmatpush2.msra.mxu0 %v935
    %1079 = vmatprep.subr.mxu0 %v934
    %1080 = vmatpush2.msra.mxu0 %v933
    %1081 = vmatprep.subr.mxu0 %v932
    %1082 = vmatpush2.msra.mxu0 %v931
    %1083 = vmatprep.subr.mxu0 %v930
    %1084 = vmatpush2.msra.mxu0 %v929
    %1085 = vmatprep.subr.mxu0 %v928
    %1086 = vmatpush2.msra.mxu0 %v927
    %1087 = vmatprep.subr.mxu0 %v926
    %1088 = vmatpush2.msra.mxu0 %v925
    %1089 = vmatprep.subr.mxu0 %v924
    %1090 = vmatpush2.msra.mxu0 %v923
    %1091 = vmatprep.subr.mxu0 %v922
    %1092 = vmatpush2.msra.mxu0 %v921
    %1093 = vmatprep.subr.mxu0 %v920
    %1094 = vmatpush2.msra.mxu0 %v919
    %1095 = vmatprep.subr.mxu0 %v918
    %1096 = vmatpush2.msra.mxu0 %v917
    %1097 = vmatprep.subr.mxu0 %v916
    %1098 = vmatpush2.msra.mxu0 %v915
    %1099 = vmatprep.subr.mxu0 %v914
    %1100 = vmatpush2.msra.mxu0 %v913
    %1101 = vmatprep.subr.mxu0 %v912
    %1102 = vmatpush2.msra.mxu0 %v911
    %1103 = vmatprep.subr.mxu0 %v910
    %1104 = vmatpush2.msra.mxu0 %v909
    %1105 = vmatprep.subr.mxu0 %v908
    %1106 = vmatpush2.msra.mxu0 %v907
    %1107 = vmatprep.subr.mxu0 %v906
    %1108 = vmatpush2.msra.mxu0 %v905
    %1109 = vmatprep.mubr.f32.mxu0 %v806
    %1110 = vmatmul.mubr.f32.gmra.mxu0 %v805
    %v1111 = vpop.f32.mrf.mxu0
    %v1112 = vadd.f32 %v1041, %v1111
    %v1113 = vpop.f32.mrf.mxu0
    %v1114 = vadd.f32 %v1043, %v1113
    %1115 = vdwg.mxu0
    %1116 = vmatprep.subr.mxu0 %v968
    %1117 = vmatpush1.msra.mxu0 %v967
    %1118 = vmatprep.subr.mxu0 %v966
    %1119 = vmatpush1.msra.mxu0 %v965
    %1120 = vmatprep.subr.mxu0 %v964
    %1121 = vmatpush1.msra.mxu0 %v963
    %1122 = vmatprep.subr.mxu0 %v962
    %1123 = vmatpush1.msra.mxu0 %v961
    %1124 = vmatprep.subr.mxu0 %v960
    %1125 = vmatpush1.msra.mxu0 %v959
    %1126 = vmatprep.subr.mxu0 %v958
    %1127 = vmatpush1.msra.mxu0 %v957
    %1128 = vmatprep.subr.mxu0 %v956
    %1129 = vmatpush1.msra.mxu0 %v955
    %1130 = vmatprep.subr.mxu0 %v954
    %1131 = vmatpush1.msra.mxu0 %v953
    %1132 = vmatprep.subr.mxu0 %v952
    %1133 = vmatpush1.msra.mxu0 %v951
    %1134 = vmatprep.subr.mxu0 %v950
    %1135 = vmatpush1.msra.mxu0 %v949
    %1136 = vmatprep.subr.mxu0 %v948
    %1137 = vmatpush1.msra.mxu0 %v947
    %1138 = vmatprep.subr.mxu0 %v946
    %1139 = vmatpush1.msra.mxu0 %v945
    %1140 = vmatprep.subr.mxu0 %v944
    %1141 = vmatpush1.msra.mxu0 %v943
    %1142 = vmatprep.subr.mxu0 %v942
    %1143 = vmatpush1.msra.mxu0 %v941
    %1144 = vmatprep.subr.mxu0 %v940
    %1145 = vmatpush1.msra.mxu0 %v939
    %1146 = vmatprep.subr.mxu0 %v938
    %1147 = vmatpush1.msra.mxu0 %v937
    %1148 = vmatprep.subr.mxu0 0.0
    %1149 = vmatpush2.msra.mxu0 0.0
    %1150 = vmatprep.subr.mxu0 0.0
    %1151 = vmatpush2.msra.mxu0 0.0
    %1152 = vmatprep.subr.mxu0 0.0
    %1153 = vmatpush2.msra.mxu0 0.0
    %1154 = vmatprep.subr.mxu0 0.0
    %1155 = vmatpush2.msra.mxu0 0.0
    %1156 = vmatprep.subr.mxu0 0.0
    %1157 = vmatpush2.msra.mxu0 0.0
    %1158 = vmatprep.subr.mxu0 0.0
    %1159 = vmatpush2.msra.mxu0 0.0
    %1160 = vmatprep.subr.mxu0 0.0
    %1161 = vmatpush2.msra.mxu0 0.0
    %1162 = vmatprep.subr.mxu0 0.0
    %1163 = vmatpush2.msra.mxu0 0.0
    %1164 = vmatprep.subr.mxu0 0.0
    %1165 = vmatpush2.msra.mxu0 0.0
    %1166 = vmatprep.subr.mxu0 0.0
    %1167 = vmatpush2.msra.mxu0 0.0
    %1168 = vmatprep.subr.mxu0 0.0
    %1169 = vmatpush2.msra.mxu0 0.0
    %1170 = vmatprep.subr.mxu0 0.0
    %1171 = vmatpush2.msra.mxu0 0.0
    %1172 = vmatprep.subr.mxu0 0.0
    %1173 = vmatpush2.msra.mxu0 0.0
    %1174 = vmatprep.subr.mxu0 0.0
    %1175 = vmatpush2.msra.mxu0 0.0
    %1176 = vmatprep.subr.mxu0 0.0
    %1177 = vmatpush2.msra.mxu0 0.0
    %1178 = vmatprep.subr.mxu0 %v970
    %1179 = vmatpush2.msra.mxu0 %v969
    %1180 = vmatprep.mubr.f32.mxu0 %v972
    %1181 = vmatmul.mubr.f32.gmra.mxu0 %v807
    %v1182 = vpop.f32.mrf.mxu0
    %v1183 = vadd.f32 %v1112, %v1182
    %v1184 = vpop.f32.mrf.mxu0
    %v1185 = vadd.f32 %v1114, %v1184
    %1186 = vdwg.mxu0
    %1189 = vrot.lane.b32.xlu0 %v1183, 127
    %v1190 = vpop.permute.xlu0 %1189
    %1191 = vrot.lane.b32.xlu0 %v1185, 127
    %v1192 = vpop.permute.xlu0 %1191
    %v1193 = vsel %vm113, %v1190, %v1192
    %vm1196 = vcmask 580608
    %v1197 = vsel %vm1196, %v1192, 0.0
    %1198 = vrot.lane.b32.xlu0 %v1183, 126
    %v1199 = vpop.permute.xlu0 %1198
    %1200 = vrot.lane.b32.xlu0 %v1185, 126
    %v1201 = vpop.permute.xlu0 %1200
    %v1202 = vsel %vm134, %v1199, %v1201
    %vm1205 = vcmask 572416
    %v1206 = vsel %vm1205, %v1201, 0.0
    %1207 = vrot.lane.b32.xlu0 %v1183, 118
    %v1208 = vpop.permute.xlu0 %1207
    %1209 = vrot.lane.b32.xlu0 %v1185, 118
    %v1210 = vpop.permute.xlu0 %1209
    %v1211 = vsel %vm167, %v1208, %v1210
    %vm1214 = vcmask 506880
    %v1215 = vsel %vm1214, %v1210, 0.0
    %1216 = vrot.lane.b32.xlu0 %v1183, 117
    %v1217 = vpop.permute.xlu0 %1216
    %1218 = vrot.lane.b32.xlu0 %v1185, 117
    %v1219 = vpop.permute.xlu0 %1218
    %v1220 = vsel %vm192, %v1217, %v1219
    %vm1223 = vcmask 498688
    %v1224 = vsel %vm1223, %v1219, 0.0
    %1225 = vrot.lane.b32.xlu0 %v1183, 116
    %v1226 = vpop.permute.xlu0 %1225
    %1227 = vrot.lane.b32.xlu0 %v1185, 116
    %v1228 = vpop.permute.xlu0 %1227
    %v1229 = vsel %vm213, %v1226, %v1228
    %vm1232 = vcmask 490496
    %v1233 = vsel %vm1232, %v1228, 0.0
    %1234 = vrot.lane.b32.xlu0 %v1183, 108
    %v1235 = vpop.permute.xlu0 %1234
    %1236 = vrot.lane.b32.xlu0 %v1185, 108
    %v1237 = vpop.permute.xlu0 %1236
    %v1238 = vsel %vm206, %v1235, %v1237
    %vm1241 = vcmask 424960
    %v1242 = vsel %vm1241, %v1237, 0.0
    %1243 = vrot.lane.b32.xlu0 %v1183, 107
    %v1244 = vpop.permute.xlu0 %1243
    %1245 = vrot.lane.b32.xlu0 %v1185, 107
    %v1246 = vpop.permute.xlu0 %1245
    %vm1247 = vcmask 875520
    %v1248 = vsel %vm1247, %v1244, %v1246
    %vm1251 = vcmask 416768
    %v1252 = vsel %vm1251, %v1246, 0.0
    %1253 = vrot.lane.b32.xlu0 %v1183, 106
    %v1254 = vpop.permute.xlu0 %1253
    %1255 = vrot.lane.b32.xlu0 %v1185, 106
    %v1256 = vpop.permute.xlu0 %1255
    %vm1257 = vcmask 867328
    %v1258 = vsel %vm1257, %v1254, %v1256
    %vm1261 = vcmask 408576
    %v1262 = vsel %vm1261, %v1256, 0.0
    %v1263 = vld [vmem:[%s12] sm:$0xff]
    %v1264 = vld [vmem:[%s13] sm:$0xff]
    %1266 = vset.pattern.permute.xlu0 0
    %1267 = vperm.xlu0 %1266, %v1264
    %v1268 = vpop.permute.xlu0 %1267
    %vm1270 = vcmask 588800
    %v1272 = vsel %vm1270, %v1263, 0
    %1274 = vmatprep.subr.mxu0 0.0
    %1275 = vmatpush1.msra.mxu0 0.0
    %1276 = vmatprep.subr.mxu0 0.0
    %1277 = vmatpush1.msra.mxu0 0.0
    %1278 = vmatprep.subr.mxu0 0.0
    %1279 = vmatpush1.msra.mxu0 0.0
    %1280 = vmatprep.subr.mxu0 0.0
    %1281 = vmatpush1.msra.mxu0 0.0
    %1282 = vmatprep.subr.mxu0 0.0
    %1283 = vmatpush1.msra.mxu0 0.0
    %1284 = vmatprep.subr.mxu0 0.0
    %1285 = vmatpush1.msra.mxu0 0.0
    %1286 = vmatprep.subr.mxu0 0.0
    %1287 = vmatpush1.msra.mxu0 0.0
    %1288 = vmatprep.subr.mxu0 %v1262
    %1289 = vmatpush1.msra.mxu0 %v1258
    %1290 = vmatprep.subr.mxu0 %v1252
    %1291 = vmatpush1.msra.mxu0 %v1248
    %1292 = vmatprep.subr.mxu0 %v1242
    %1293 = vmatpush1.msra.mxu0 %v1238
    %1294 = vmatprep.subr.mxu0 %v1233
    %1295 = vmatpush1.msra.mxu0 %v1229
    %1296 = vmatprep.subr.mxu0 %v1224
    %1297 = vmatpush1.msra.mxu0 %v1220
    %1298 = vmatprep.subr.mxu0 %v1215
    %1299 = vmatpush1.msra.mxu0 %v1211
    %1300 = vmatprep.subr.mxu0 %v1206
    %1301 = vmatpush1.msra.mxu0 %v1202
    %1302 = vmatprep.subr.mxu0 %v1197
    %1303 = vmatpush1.msra.mxu0 %v1193
    %1304 = vmatprep.subr.mxu0 %v1185
    %1305 = vmatpush1.msra.mxu0 %v1183
    %1306 = vmatprep.subr.mxu0 0.0
    %1307 = vmatpush2.msra.mxu0 0.0
    %1308 = vmatprep.subr.mxu0 0.0
    %1309 = vmatpush2.msra.mxu0 0.0
    %1310 = vmatprep.subr.mxu0 0.0
    %1311 = vmatpush2.msra.mxu0 0.0
    %1312 = vmatprep.subr.mxu0 0.0
    %1313 = vmatpush2.msra.mxu0 0.0
    %1314 = vmatprep.subr.mxu0 0.0
    %1315 = vmatpush2.msra.mxu0 0.0
    %1316 = vmatprep.subr.mxu0 0.0
    %1317 = vmatpush2.msra.mxu0 0.0
    %1318 = vmatprep.subr.mxu0 0.0
    %1319 = vmatpush2.msra.mxu0 0.0
    %1320 = vmatprep.subr.mxu0 0.0
    %1321 = vmatpush2.msra.mxu0 0.0
    %1322 = vmatprep.subr.mxu0 0.0
    %1323 = vmatpush2.msra.mxu0 0.0
    %1324 = vmatprep.subr.mxu0 0.0
    %1325 = vmatpush2.msra.mxu0 0.0
    %1326 = vmatprep.subr.mxu0 0.0
    %1327 = vmatpush2.msra.mxu0 0.0
    %1328 = vmatprep.subr.mxu0 0.0
    %1329 = vmatpush2.msra.mxu0 0.0
    %1330 = vmatprep.subr.mxu0 0.0
    %1331 = vmatpush2.msra.mxu0 0.0
    %1332 = vmatprep.subr.mxu0 0.0
    %1333 = vmatpush2.msra.mxu0 0.0
    %1334 = vmatprep.subr.mxu0 0.0
    %1335 = vmatpush2.msra.mxu0 0.0
    %1336 = vmatprep.subr.mxu0 0.0
    %1337 = vmatpush2.msra.mxu0 0.0
    %1338 = vmatprep.mubr.f32.mxu0 0.0
    %1339 = vmatmul.mubr.f32.gmra.mxu0 %v1272
    %v1340 = vpop.f32.mrf.mxu0
    %v1341 = vadd.f32 %v1268, %v1340
    %v1342 = vpop.f32.mrf.mxu0
    %v1343 = vadd.f32 %v1268, %v1342
    %1344 = vdwg.mxu0
    %v1345 = vld [vmem:[%s16] sm:$0x3]
    %v1347 = vlaneseq
    %v1348 = vshrl.u32 %v1347, 7
    %v1349 = vsub.s32 0, %v1348
    %v1350 = vrot.slane %v1345, %v1349
    %v1351 = vlaneseq
    %v1352 = vshrl.u32 %v1351, 7
    %v1353 = vsub.s32 1, %v1352
    %v1354 = vrot.slane %v1345, %v1353
    %v1357 = vmul.f32 %v1341, %v1350
    %v1358 = vmul.f32 %v1343, %v1354
    %v1359 = vsel %vm1270, %v1358, 0.0
    %v1360 = vadd.f32 %v1357, %v1359
    %1361 = vadd.xlane.f32.xlu0 %v1360
    %v1362 = vpop.xlane.xlu0 %1361
    %v1363 = vmul.f32 %v1357, %v1341
    %v1364 = vmul.f32 %v1358, %v1343
    %v1365 = vsel %vm1270, %v1364, 0.0
    %v1366 = vadd.f32 %v1363, %v1365
    %1367 = vadd.xlane.f32.xlu0 %v1366
    %v1368 = vpop.xlane.xlu0 %1367
    %v1369 = vmul.f32 %v1362, 0.0078125
    %v1370 = vmul.f32 %v1368, 0.0078125
    %v1371 = vmul.f32 %v1369, %v1369
    %v1372 = vsub.f32 %v1370, %v1371
    %v1373 = vmax.f32 %v1372, 0.0
    %v1374 = vld [vmem:[%s14] sm:$0xff]
    %v1375 = vadd.f32 %v1373, 1e-05
    %v1376 = vrsqrt.pop %v1375
    %v1377 = vmul.f32 %v1374, %v1376
    %v1378 = vld [vmem:[%s15] sm:$0xff]
    %v1379 = vmul.f32 %v1369, %v1377
    %v1380 = vsub.f32 %v1378, %v1379
    %1382 = vset.pattern.permute.xlu0 0
    %1383 = vperm.xlu0 %1382, %v1377
    %v1384 = vpop.permute.xlu0 %1383
    %v1386 = vmul.f32 %v1341, %v1384
    %v1387 = vmul.f32 %v1343, %v1384
    %1389 = vset.pattern.permute.xlu0 0
    %1390 = vperm.xlu0 %1389, %v1380
    %v1391 = vpop.permute.xlu0 %1390
    %v1393 = vadd.f32 %v1386, %v1391
    %v1394 = vadd.f32 %v1387, %v1391
    %v1395 = vmax.f32 %v1393, 0.0
    %v1396 = vmax.f32 %v1394, 0.0
    %1399 = vrot.lane.b32.xlu0 %v1395, 127
    %v1400 = vpop.permute.xlu0 %1399
    %1401 = vrot.lane.b32.xlu0 %v1396, 127
    %v1402 = vpop.permute.xlu0 %1401
    %v1403 = vsel %vm113, %v1400, %v1402
    %v1406 = vsel %vm1196, %v1402, 0.0
    %v1407 = vmax.f32 %v1395, %v1403
    %v1408 = vmax.f32 %v1396, %v1406
    %1411 = vrot.lane.b32.xlu0 %v1407, 118
    %v1412 = vpop.permute.xlu0 %1411
    %1413 = vrot.lane.b32.xlu0 %v1408, 118
    %v1414 = vpop.permute.xlu0 %1413
    %v1415 = vsel %vm167, %v1412, %v1414
    %v1418 = vsel %vm1214, %v1414, 0.0
    %v1419 = vmax.f32 %v1407, %v1415
    %v1420 = vmax.f32 %v1408, %v1418
    %v1421 = vld [vmem:[%s17] sm:$0xff]
    %v1422 = vmul.f32 %v1421, %v772
    %v1423 = vsel %vm637, %v1422, 0.0
    %1424 = vadd.xlane.f32.xlu0 %v1423
    %v1425 = vpop.xlane.xlu0 %1424
    %v1426 = vld [vmem:[%s19] sm:$0xff]
    %v1427 = vadd.f32 %v1425, %v1426
    %v1428 = vld [vmem:[%s18] sm:$0xff]
    %v1429 = vmul.f32 %v1428, %v772
    %v1430 = vsel %vm637, %v1429, 0.0
    %1431 = vadd.xlane.f32.xlu0 %v1430
    %v1432 = vpop.xlane.xlu0 %1431
    %v1433 = vld [vmem:[%s20] sm:$0xff]
    %v1434 = vadd.f32 %v1432, %v1433
    %1436 = vset.pattern.permute.xlu0 0
    %1437 = vperm.xlu0 %1436, %v1427
    %v1438 = vpop.permute.xlu0 %1437
    %v1440 = vmul.f32 %v1438, %v1419
    %v1441 = vmul.f32 %v1438, %v1420
    %1443 = vset.pattern.permute.xlu0 0
    %1444 = vperm.xlu0 %1443, %v1434
    %v1445 = vpop.permute.xlu0 %1444
    %v1447 = vadd.f32 %v1440, %v1445
    %v1448 = vadd.f32 %v1441, %v1445
    %v1449 = vld [vmem:[%s21] sm:$0xff]
    %v1450 = vld [vmem:[%s21 + $0x8] sm:$0xff]
    %v1451 = vld [vmem:[%s21 + $0x10] sm:$0xff]
    %v1452 = vld [vmem:[%s21 + $0x18] sm:$0xff]
    %v1453 = vld [vmem:[%s21 + $0x20] sm:$0xff]
    %v1454 = vld [vmem:[%s21 + $0x28] sm:$0xff]
    %v1455 = vld [vmem:[%s21 + $0x30] sm:$0xff]
    %v1456 = vld [vmem:[%s21 + $0x38] sm:$0xff]
    %v1457 = vld [vmem:[%s21 + $0x40] sm:$0xff]
    %v1458 = vld [vmem:[%s21 + $0x48] sm:$0xff]
    %v1459 = vld [vmem:[%s21 + $0x50] sm:$0xff]
    %v1460 = vld [vmem:[%s21 + $0x58] sm:$0xff]
    %v1461 = vld [vmem:[%s21 + $0x60] sm:$0xff]
    %v1462 = vld [vmem:[%s21 + $0x68] sm:$0xff]
    %v1463 = vld [vmem:[%s21 + $0x70] sm:$0xff]
    %v1464 = vld [vmem:[%s21 + $0x78] sm:$0xff]
    %v1465 = vld [vmem:[%s21 + $0x80] sm:$0xff]
    %v1466 = vld [vmem:[%s21 + $0x88] sm:$0xff]
    %v1467 = vld [vmem:[%s21 + $0x90] sm:$0xff]
    %v1468 = vld [vmem:[%s21 + $0x98] sm:$0xff]
    %v1469 = vld [vmem:[%s21 + $0xa0] sm:$0xff]
    %v1470 = vld [vmem:[%s21 + $0xa8] sm:$0xff]
    %v1471 = vld [vmem:[%s21 + $0xb0] sm:$0xff]
    %v1472 = vld [vmem:[%s21 + $0xb8] sm:$0xff]
    %v1473 = vld [vmem:[%s21 + $0xc0] sm:$0xff]
    %v1475 = vsel %vm1270, %v1448, 0
    %1477 = vmatprep.subr.mxu0 0.0
    %1478 = vmatpush1.msra.mxu0 %v1464
    %1479 = vmatprep.subr.mxu0 0.0
    %1480 = vmatpush1.msra.mxu0 %v1463
    %1481 = vmatprep.subr.mxu0 0.0
    %1482 = vmatpush1.msra.mxu0 %v1462
    %1483 = vmatprep.subr.mxu0 0.0
    %1484 = vmatpush1.msra.mxu0 %v1461
    %1485 = vmatprep.subr.mxu0 0.0
    %1486 = vmatpush1.msra.mxu0 %v1460
    %1487 = vmatprep.subr.mxu0 0.0
    %1488 = vmatpush1.msra.mxu0 %v1459
    %1489 = vmatprep.subr.mxu0 0.0
    %1490 = vmatpush1.msra.mxu0 %v1458
    %1491 = vmatprep.subr.mxu0 0.0
    %1492 = vmatpush1.msra.mxu0 %v1457
    %1493 = vmatprep.subr.mxu0 0.0
    %1494 = vmatpush1.msra.mxu0 %v1456
    %1495 = vmatprep.subr.mxu0 0.0
    %1496 = vmatpush1.msra.mxu0 %v1455
    %1497 = vmatprep.subr.mxu0 0.0
    %1498 = vmatpush1.msra.mxu0 %v1454
    %1499 = vmatprep.subr.mxu0 0.0
    %1500 = vmatpush1.msra.mxu0 %v1453
    %1501 = vmatprep.subr.mxu0 0.0
    %1502 = vmatpush1.msra.mxu0 %v1452
    %1503 = vmatprep.subr.mxu0 0.0
    %1504 = vmatpush1.msra.mxu0 %v1451
    %1505 = vmatprep.subr.mxu0 0.0
    %1506 = vmatpush1.msra.mxu0 %v1450
    %1507 = vmatprep.subr.mxu0 0.0
    %1508 = vmatpush1.msra.mxu0 %v1449
    %1509 = vmatprep.subr.mxu0 0.0
    %1510 = vmatpush2.msra.mxu0 0.0
    %1511 = vmatprep.subr.mxu0 0.0
    %1512 = vmatpush2.msra.mxu0 0.0
    %1513 = vmatprep.subr.mxu0 0.0
    %1514 = vmatpush2.msra.mxu0 0.0
    %1515 = vmatprep.subr.mxu0 0.0
    %1516 = vmatpush2.msra.mxu0 0.0
    %1517 = vmatprep.subr.mxu0 0.0
    %1518 = vmatpush2.msra.mxu0 0.0
    %1519 = vmatprep.subr.mxu0 0.0
    %1520 = vmatpush2.msra.mxu0 0.0
    %1521 = vmatprep.subr.mxu0 0.0
    %1522 = vmatpush2.msra.mxu0 0.0
    %1523 = vmatprep.subr.mxu0 0.0
    %1524 = vmatpush2.msra.mxu0 %v1473
    %1525 = vmatprep.subr.mxu0 0.0
    %1526 = vmatpush2.msra.mxu0 %v1472
    %1527 = vmatprep.subr.mxu0 0.0
    %1528 = vmatpush2.msra.mxu0 %v1471
    %1529 = vmatprep.subr.mxu0 0.0
    %1530 = vmatpush2.msra.mxu0 %v1470
    %1531 = vmatprep.subr.mxu0 0.0
    %1532 = vmatpush2.msra.mxu0 %v1469
    %1533 = vmatprep.subr.mxu0 0.0
    %1534 = vmatpush2.msra.mxu0 %v1468
    %1535 = vmatprep.subr.mxu0 0.0
    %1536 = vmatpush2.msra.mxu0 %v1467
    %1537 = vmatprep.subr.mxu0 0.0
    %1538 = vmatpush2.msra.mxu0 %v1466
    %1539 = vmatprep.subr.mxu0 0.0
    %1540 = vmatpush2.msra.mxu0 %v1465
    %1541 = vmatprep.mubr.f32.mxu0 %v1475
    %1542 = vmatmul.mubr.f32.gmra.mxu0 %v1447
    %v1543 = vpop.f32.mrf.mxu0
    %v1544 = vadd.f32 0.0, %v1543
    %v1545 = vpop.f32.mrf.mxu0
    %1546 = vdwg.mxu0
    %1548 = vrot.lane.b32.xlu0 %v1544, 126
    %v1549 = vpop.permute.xlu0 %1548
    %1551 = vrot.lane.b32.xlu0 %v1544, 124
    %v1552 = vpop.permute.xlu0 %1551
    %1554 = vrot.lane.b32.xlu0 %v1544, 122
    %v1555 = vpop.permute.xlu0 %1554
    %1557 = vrot.lane.b32.xlu0 %v1544, 120
    %v1558 = vpop.permute.xlu0 %1557
    %1560 = vrot.lane.b32.xlu0 %v1544, 118
    %v1561 = vpop.permute.xlu0 %1560
    %1563 = vrot.lane.b32.xlu0 %v1544, 116
    %v1564 = vpop.permute.xlu0 %1563
    %1566 = vrot.lane.b32.xlu0 %v1544, 114
    %v1567 = vpop.permute.xlu0 %1566
    %1569 = vrot.lane.b32.xlu0 %v1544, 112
    %v1570 = vpop.permute.xlu0 %1569
    %1572 = vrot.lane.b32.xlu0 %v1544, 110
    %v1573 = vpop.permute.xlu0 %1572
    %1575 = vrot.lane.b32.xlu0 %v1544, 108
    %v1576 = vpop.permute.xlu0 %1575
    %1578 = vrot.lane.b32.xlu0 %v1544, 106
    %v1579 = vpop.permute.xlu0 %1578
    %1581 = vrot.lane.b32.xlu0 %v1544, 104
    %v1582 = vpop.permute.xlu0 %1581
    %1584 = vrot.lane.b32.xlu0 %v1544, 102
    %v1585 = vpop.permute.xlu0 %1584
    %1587 = vrot.lane.b32.xlu0 %v1544, 100
    %v1588 = vpop.permute.xlu0 %1587
    %1590 = vrot.lane.b32.xlu0 %v1544, 98
    %v1591 = vpop.permute.xlu0 %1590
    %v1593 = vld [vmem:[%s22] sm:$0x1f]
    %v1594 = vld [vmem:[%s23] sm:$0x1f]
    %1596 = vset.pattern.permute.xlu0 0
    %1597 = vperm.xlu0 %1596, %v1594
    %v1598 = vpop.permute.xlu0 %1597
    %1600 = vmatprep.subr.mxu0 0.0
    %1601 = vmatpush1.msra.mxu0 %v1591
    %1602 = vmatprep.subr.mxu0 0.0
    %1603 = vmatpush1.msra.mxu0 %v1588
    %1604 = vmatprep.subr.mxu0 0.0
    %1605 = vmatpush1.msra.mxu0 %v1585
    %1606 = vmatprep.subr.mxu0 0.0
    %1607 = vmatpush1.msra.mxu0 %v1582
    %1608 = vmatprep.subr.mxu0 0.0
    %1609 = vmatpush1.msra.mxu0 %v1579
    %1610 = vmatprep.subr.mxu0 0.0
    %1611 = vmatpush1.msra.mxu0 %v1576
    %1612 = vmatprep.subr.mxu0 0.0
    %1613 = vmatpush1.msra.mxu0 %v1573
    %1614 = vmatprep.subr.mxu0 0.0
    %1615 = vmatpush1.msra.mxu0 %v1570
    %1616 = vmatprep.subr.mxu0 0.0
    %1617 = vmatpush1.msra.mxu0 %v1567
    %1618 = vmatprep.subr.mxu0 0.0
    %1619 = vmatpush1.msra.mxu0 %v1564
    %1620 = vmatprep.subr.mxu0 0.0
    %1621 = vmatpush1.msra.mxu0 %v1561
    %1622 = vmatprep.subr.mxu0 0.0
    %1623 = vmatpush1.msra.mxu0 %v1558
    %1624 = vmatprep.subr.mxu0 0.0
    %1625 = vmatpush1.msra.mxu0 %v1555
    %1626 = vmatprep.subr.mxu0 0.0
    %1627 = vmatpush1.msra.mxu0 %v1552
    %1628 = vmatprep.subr.mxu0 0.0
    %1629 = vmatpush1.msra.mxu0 %v1549
    %1630 = vmatprep.subr.mxu0 0.0
    %1631 = vmatpush1.msra.mxu0 %v1544
    %1632 = vmatprep.subr.mxu0 0.0
    %1633 = vmatpush2.msra.mxu0 0.0
    %1634 = vmatprep.subr.mxu0 0.0
    %1635 = vmatpush2.msra.mxu0 0.0
    %1636 = vmatprep.subr.mxu0 0.0
    %1637 = vmatpush2.msra.mxu0 0.0
    %1638 = vmatprep.subr.mxu0 0.0
    %1639 = vmatpush2.msra.mxu0 0.0
    %1640 = vmatprep.subr.mxu0 0.0
    %1641 = vmatpush2.msra.mxu0 0.0
    %1642 = vmatprep.subr.mxu0 0.0
    %1643 = vmatpush2.msra.mxu0 0.0
    %1644 = vmatprep.subr.mxu0 0.0
    %1645 = vmatpush2.msra.mxu0 0.0
    %1646 = vmatprep.subr.mxu0 0.0
    %1647 = vmatpush2.msra.mxu0 0.0
    %1648 = vmatprep.subr.mxu0 0.0
    %1649 = vmatpush2.msra.mxu0 0.0
    %1650 = vmatprep.subr.mxu0 0.0
    %1651 = vmatpush2.msra.mxu0 0.0
    %1652 = vmatprep.subr.mxu0 0.0
    %1653 = vmatpush2.msra.mxu0 0.0
    %1654 = vmatprep.subr.mxu0 0.0
    %1655 = vmatpush2.msra.mxu0 0.0
    %1656 = vmatprep.subr.mxu0 0.0
    %1657 = vmatpush2.msra.mxu0 0.0
    %1658 = vmatprep.subr.mxu0 0.0
    %1659 = vmatpush2.msra.mxu0 0.0
    %1660 = vmatprep.subr.mxu0 0.0
    %1661 = vmatpush2.msra.mxu0 0.0
    %1662 = vmatprep.subr.mxu0 0.0
    %1663 = vmatpush2.msra.mxu0 0.0
    %1664 = vmatprep.mubr.f32.mxu0 0.0
    %1665 = vmatmul.mubr.f32.gmra.mxu0 %v1593
    %v1666 = vpop.f32.mrf.mxu0
    %v1667 = vadd.f32 %v1598, %v1666
    %v1668 = vpop.f32.mrf.mxu0
    %1669 = vdwg.mxu0
    %vm1670 = vcmask 12288
    %1671 = vst.msk [vmem:[%s24] sm:$0x1f] %vm1670, %v1667
    // Predicated region
    $region102: #{_lambda_.1} parent=1 // pred_check
      _
    $region103: #{_lambda_.1} parent=1 // pred_check_branch
      %1673 = sbr.rel (0) target = $region105
    $region104: #{_lambda_.1} parent=1 // pred_region
      _
    $region105: #{_lambda_.1} parent=1 // pred_fallthru
      _
    // Predicated region
    $region106: #{_lambda_.1} parent=1 // pred_check
      _
    $region107: #{_lambda_.1} parent=1 // pred_check_branch
      %1675 = sbr.rel (0) target = $region109
    $region108: #{_lambda_.1} parent=1 // pred_region
      _
    $region109: #{_lambda_.1} parent=1 // pred_fallthru
      _
    %1676 = vsyncpa [#allocation3], 1

</llo_original>
